<compile_context>
chip_gen: v7x
topology: tpu7x:2x2x1
jax: 0.10.0
libtpu: 0.0.40
codegen_flags: <defaults>
</compile_context>

<pallas_src>
import math

import jax
import jax.numpy as jnp
from jax import lax
from jax.experimental import pallas as pl
from jax.experimental.pallas import tpu as pltpu


def _round_up(x, m):
    return ((x + m - 1) // m) * m


def _make_mha_kernel(num_heads, d_pad, e_pad, bblk, s_pad, s_actual, compute_dtype):
    H, Dp = num_heads, d_pad
    M = bblk * s_pad
    need_key_mask = s_pad != s_actual

    def kernel(x_ref, wqkv_ref, bqkv_ref, wp_ref, bp_ref, o_ref):
        # ---- fused QKV projection on the flattened (Bblk*S_pad, E_pad) slab ----
        x2 = x_ref[...].reshape(M, e_pad)                    # major-dim merge: free
        qkv = jnp.dot(x2, wqkv_ref[...],
                      preferred_element_type=jnp.float32) + bqkv_ref[...]
        # qkv: (M, 3*H*Dp) f32.  1/sqrt(emb_size) is pre-folded into the Q slice.

        if need_key_mask:
            # Additive bias that kills padded key positions (padded x rows are
            # zero, so their K rows equal the bias and must be masked out).
            key_bias = jnp.where(
                lax.broadcasted_iota(jnp.int32, (1, s_pad, s_pad), 2) < s_actual,
                0.0, -1e30).astype(jnp.float32)

        acc = jnp.zeros((M, e_pad), jnp.float32)
        for h in range(H):                                   # H is small: unrolled
            # 128-lane-aligned slices of the fused QKV result (no relayout).
            q_h = qkv[:, h * Dp:(h + 1) * Dp]
            k_h = qkv[:, (H + h) * Dp:(H + h + 1) * Dp]
            v_h = qkv[:, (2 * H + h) * Dp:(2 * H + h + 1) * Dp]
            q3 = q_h.reshape(bblk, s_pad, Dp).astype(compute_dtype)
            k3 = k_h.reshape(bblk, s_pad, Dp).astype(compute_dtype)
            v3 = v_h.reshape(bblk, s_pad, Dp).astype(compute_dtype)

            # energy: batched over the batch block (one dot_general per head).
            e = jnp.einsum('bqd,bkd->bqk', q3, k3,
                           preferred_element_type=jnp.float32)   # (Bblk,S,S) f32
            if need_key_mask:
                e = e + key_bias
            m = jnp.max(e, axis=-1, keepdims=True)
            p = jnp.exp(e - m)                                    # EUP
            att = p * pl.reciprocal(jnp.sum(p, axis=-1, keepdims=True),
                                    approx=True)                  # EUP reciprocal
            ctx = jnp.einsum('bqk,bkd->bqd', att.astype(compute_dtype), v3,
                             preferred_element_type=jnp.float32)  # (Bblk,S,Dp)

            # Per-head slice of the projection weights (Dp rows, head-padded with
            # zeros), accumulated straight into the output slab: no concatenate.
            acc = acc + jnp.dot(ctx.reshape(M, Dp).astype(compute_dtype),
                                wp_ref[h * Dp:(h + 1) * Dp, :],
                                preferred_element_type=jnp.float32)

        out = acc + bp_ref[...]
        o_ref[...] = out.reshape(bblk, s_pad, e_pad).astype(o_ref.dtype)

    return kernel


def _choose_batch_block(B, s_pad, e_pad, num_heads, d_pad, in_bytes, out_bytes):
    # Target >=256 flattened rows (fills a v6e/v7x 256-wide MXU; >=128 on v5e).
    bblk = min(B, max(1, -(-256 // s_pad)))
    # Keep the grid length >= 2 so dimension_semantics=("parallel",) can shard
    # steps across the two TensorCores on v7x.
    if B >= 2:
        bblk = min(bblk, -(-B // 2))
    # Rough per-batch-row VMEM footprint: double-buffered in/out blocks plus the
    # f32 qkv slab, per-head temporaries and the accumulator.  Cap the
    # batch-block-proportional buffers at ~8 MiB (v7x: 32 MiB scoped default).
    per_row = (e_pad * (2 * in_bytes + 2 * out_bytes + 8)
               + 3 * num_heads * d_pad * 4 + 6 * d_pad * 4)
    cap = max(1, (8 << 20) // (s_pad * per_row))
    return max(1, min(bblk, cap))


def multi_head_attention(x, wq, bq, wk, bk, wv, bv, wp, bp, *, num_heads,
                         compute_dtype=jnp.bfloat16):
    """Fused MHA forward matching the EEG-Conformer MultiHeadAttention (eval).

    x: (B, S, E).  w*: (E, E) in (in, out) layout (kernel computes x @ W; callers
    holding PyTorch nn.Linear weights must transpose).  b*: (E,).
    Returns (B, S, E) in x.dtype.
    """
    B, S, E = x.shape
    assert E % num_heads == 0
    H = num_heads
    D = E // H
    f32 = jnp.float32
    cdt = compute_dtype

    LANE, SUB = 128, 8
    E_pad = _round_up(E, LANE)
    S_pad = _round_up(S, SUB)
    Dp = _round_up(D, LANE)          # per-head lane padding -> lane-dense q/k/v/ctx
    HDp = H * Dp

    Bblk = _choose_batch_block(B, S_pad, E_pad, H, Dp,
                               jnp.dtype(cdt).itemsize, jnp.dtype(x.dtype).itemsize)
    B_pad = _round_up(B, Bblk)
    n_blocks = B_pad // Bblk

    inv_scale = 1.0 / math.sqrt(E)   # PyTorch scales by sqrt(emb_size), not head_dim

    # ---- repack / pad parameters once in the wrapper --------------------------
    def pack_qkv_w(w, scale):        # (E,E) -> (E_pad, H*Dp), head-padded columns
        w3 = (w.astype(f32) * scale).reshape(E, H, D)
        out = jnp.zeros((E_pad, H, Dp), f32).at[:E, :, :D].set(w3)
        return out.reshape(E_pad, HDp)

    def pack_qkv_b(b, scale):        # (E,) -> (1, H*Dp)
        b2 = (b.astype(f32) * scale).reshape(H, D)
        out = jnp.zeros((1, H, Dp), f32).at[0, :, :D].set(b2)
        return out.reshape(1, HDp)

    # 1/sqrt(emb_size) folded into the Q weights/bias (zero in-kernel cost).
    wqkv = jnp.concatenate([pack_qkv_w(wq, inv_scale),
                            pack_qkv_w(wk, 1.0),
                            pack_qkv_w(wv, 1.0)], axis=1).astype(cdt)
    bqkv = jnp.concatenate([pack_qkv_b(bq, inv_scale),
                            pack_qkv_b(bk, 1.0),
                            pack_qkv_b(bv, 1.0)], axis=1)            # f32

    wp3 = wp.astype(f32).reshape(H, D, E)
    wp_hp = jnp.zeros((H, Dp, E_pad), f32).at[:, :D, :E].set(wp3)
    wp_hp = wp_hp.reshape(HDp, E_pad).astype(cdt)
    bp_p = jnp.zeros((1, E_pad), f32).at[:, :E].set(bp.reshape(1, E).astype(f32))

    x_p = jnp.zeros((B_pad, S_pad, E_pad), cdt).at[:B, :S, :E].set(x.astype(cdt))

    kernel = _make_mha_kernel(H, Dp, E_pad, Bblk, S_pad, S, cdt)

    # Advisory cost hint for the XLA scheduler.
    M_tot = B_pad * S_pad
    flops = (2 * M_tot * E_pad * 3 * HDp                 # fused QKV projection
             + 2 * B_pad * H * S_pad * S_pad * Dp        # energy
             + 2 * B_pad * H * S_pad * S_pad * Dp        # att @ v
             + 2 * M_tot * HDp * E_pad)                  # output projection
    transcendentals = B_pad * H * S_pad * S_pad
    bytes_accessed = int(x_p.size * jnp.dtype(cdt).itemsize
                         + B_pad * S_pad * E_pad * jnp.dtype(x.dtype).itemsize
                         + wqkv.size * jnp.dtype(cdt).itemsize
                         + wp_hp.size * jnp.dtype(cdt).itemsize
                         + (bqkv.size + bp_p.size) * 4)

    batch_blk = lambda b: (b, 0, 0)  # per-batch-block tile of x / out
    pinned = lambda b: (0, 0)        # grid-invariant weights -> resident in VMEM

    out = pl.pallas_call(
        kernel,
        out_shape=jax.ShapeDtypeStruct((B_pad, S_pad, E_pad), x.dtype),
        grid=(n_blocks,),
        in_specs=[
            pl.BlockSpec((Bblk, S_pad, E_pad), batch_blk),   # x
            pl.BlockSpec((E_pad, 3 * HDp), pinned),          # Wqkv (head-padded)
            pl.BlockSpec((1, 3 * HDp), pinned),              # bqkv
            pl.BlockSpec((HDp, E_pad), pinned),              # Wp (head-padded rows)
            pl.BlockSpec((1, E_pad), pinned),                # bp
        ],
        out_specs=pl.BlockSpec((Bblk, S_pad, E_pad), batch_blk),
        compiler_params=pltpu.CompilerParams(
            dimension_semantics=("parallel",)),
        cost_estimate=pl.CostEstimate(
            flops=flops, transcendentals=transcendentals,
            bytes_accessed=bytes_accessed),
    )(x_p, wqkv, bqkv, wp_hp, bp_p)

    return out[:B, :S, :E]


def _reference(x, wq, bq, wk, bk, wv, bv, wp, bp, num_heads):
    """Pure-JAX mirror of the PyTorch forward (eval mode, mask=None)."""
    B, S, E = x.shape
    D = E // num_heads
    q = x @ wq + bq
    k = x @ wk + bk
    v = x @ wv + bv
    split = lambda t: t.reshape(B, S, num_heads, D).transpose(0, 2, 1, 3)
    q, k, v = split(q), split(k), split(v)
    energy = jnp.einsum('bhqd,bhkd->bhqk', q, k)
    att = jax.nn.softmax(energy / (E ** 0.5), axis=-1)
    out = jnp.einsum('bhal,bhlv->bhav', att, v)
    out = out.transpose(0, 2, 1, 3).reshape(B, S, E)
    return out @ wp + bp


if __name__ == "__main__":
    key = jax.random.PRNGKey(0)
    B, S, E, H = 2, 8, 32, 4          # batch, seq, emb_size, num_heads

    ks = jax.random.split(key, 10)
    x = jax.random.normal(ks[0], (B, S, E), jnp.float32)

    scale = 1.0 / math.sqrt(E)
    wq = jax.random.normal(ks[1], (E, E), jnp.float32) * scale
    bq = jax.random.normal(ks[2], (E,), jnp.float32) * 0.01
    wk = jax.random.normal(ks[3], (E, E), jnp.float32) * scale
    bk = jax.random.normal(ks[4], (E,), jnp.float32) * 0.01
    wv = jax.random.normal(ks[5], (E, E), jnp.float32) * scale
    bv = jax.random.normal(ks[6], (E,), jnp.float32) * 0.01
    wp = jax.random.normal(ks[7], (E, E), jnp.float32) * scale
    bp = jax.random.normal(ks[8], (E,), jnp.float32) * 0.01

    ref = _reference(x, wq, bq, wk, bk, wv, bv, wp, bp, H)

    # f32 compute path: tight semantic check.
    out_f32 = multi_head_attention(x, wq, bq, wk, bk, wv, bv, wp, bp,
                                   num_heads=H, compute_dtype=jnp.float32)
    out_f32 = jax.block_until_ready(out_f32)
    assert out_f32.shape == (B, S, E)
    err_f32 = float(jnp.max(jnp.abs(out_f32 - ref)))
    assert jnp.allclose(out_f32, ref, atol=1e-2, rtol=1e-2), err_f32

    # bf16 compute path (default / performance configuration): loose check.
    out_bf16 = multi_head_attention(x, wq, bq, wk, bk, wv, bv, wp, bp,
                                    num_heads=H, compute_dtype=jnp.bfloat16)
    out_bf16 = jax.block_until_ready(out_bf16)
    err_bf16 = float(jnp.max(jnp.abs(out_bf16 - ref)))
    assert jnp.allclose(out_bf16, ref, atol=5e-2, rtol=5e-2), err_bf16

    # Ragged shapes: exercise batch padding, sequence padding and key masking.
    B2, S2 = 3, 7
    x2 = jax.random.normal(ks[9], (B2, S2, E), jnp.float32)
    out2 = multi_head_attention(x2, wq, bq, wk, bk, wv, bv, wp, bp,
                                num_heads=H, compute_dtype=jnp.float32)
    out2 = jax.block_until_ready(out2)
    ref2 = _reference(x2, wq, bq, wk, bk, wv, bv, wp, bp, H)
    err2 = float(jnp.max(jnp.abs(out2 - ref2)))
    assert out2.shape == (B2, S2, E)
    assert jnp.allclose(out2, ref2, atol=1e-2, rtol=1e-2), err2

    print("KERNEL_OK")
</pallas_src>

<mosaic_0001>
module attributes {stable_mosaic.version = 11 : i64} {
  func.func @kernel(%arg0: i32, %arg1: memref<1x8x128xf32, #tpu.memory_space<vmem>>, %arg2: memref<128x1536xf32, #tpu.memory_space<vmem>>, %arg3: memref<1x1536xf32, #tpu.memory_space<vmem>>, %arg4: memref<512x128xf32, #tpu.memory_space<vmem>>, %arg5: memref<1x128xf32, #tpu.memory_space<vmem>>, %arg6: memref<1x8x128xf32, #tpu.memory_space<vmem>>) attributes {dimension_semantics = [#tpu.dimension_semantics<parallel>], iteration_bounds = array<i64: 2>, scalar_prefetch = 0 : i64, scratch_operands = 0 : i64, tpu.core_type = #tpu.core_type<tc>, window_params = [{transform_indices = @transform_0, window_bounds = array<i64: 1, 8, 128>}, {pipeline_mode = #tpu.pipeline_mode<synchronous>, transform_indices = @transform_1, window_bounds = array<i64: 128, 1536>}, {pipeline_mode = #tpu.pipeline_mode<synchronous>, transform_indices = @transform_2, window_bounds = array<i64: 1, 1536>}, {pipeline_mode = #tpu.pipeline_mode<synchronous>, transform_indices = @transform_3, window_bounds = array<i64: 512, 128>}, {pipeline_mode = #tpu.pipeline_mode<synchronous>, transform_indices = @transform_4, window_bounds = array<i64: 1, 128>}, {transform_indices = @transform_5, window_bounds = array<i64: 1, 8, 128>}]} {
    %c0 = arith.constant 0 : index
    %c0_0 = arith.constant 0 : index
    %c0_1 = arith.constant 0 : index
    %0 = vector.load %arg1[%c0, %c0_0, %c0_1] : memref<1x8x128xf32, #tpu.memory_space<vmem>>, vector<1x8x128xf32>
    %1 = vector.shape_cast %0 : vector<1x8x128xf32> to vector<8x128xf32>
    %c0_2 = arith.constant 0 : index
    %c0_3 = arith.constant 0 : index
    %2 = vector.load %arg2[%c0_2, %c0_3] : memref<128x1536xf32, #tpu.memory_space<vmem>>, vector<128x1536xf32>
    %cst = arith.constant dense<0.000000e+00> : vector<8x1536xf32>
    %3 = tpu.matmul %1, %2, %cst {dimension_numbers = #tpu.dot_dimension_numbers<[1], [0], [0], [1], [0, 0, 1, 1], [], []>} : vector<8x128xf32>, vector<128x1536xf32>, vector<8x1536xf32> -> vector<8x1536xf32>
    %c0_4 = arith.constant 0 : index
    %c0_5 = arith.constant 0 : index
    %4 = vector.load %arg3[%c0_4, %c0_5] : memref<1x1536xf32, #tpu.memory_space<vmem>>, vector<1x1536xf32>
    %5 = vector.broadcast %4 : vector<1x1536xf32> to vector<8x1536xf32>
    %6 = arith.addf %3, %5 : vector<8x1536xf32>
    %cst_6 = arith.constant 0.000000e+00 : f32
    %7 = vector.broadcast %cst_6 : f32 to vector<8x128xf32>
    %8 = vector.extract_strided_slice %6 {offsets = [0, 0], sizes = [8, 128], strides = [1, 1]} : vector<8x1536xf32> to vector<8x128xf32>
    %9 = vector.extract_strided_slice %6 {offsets = [0, 512], sizes = [8, 128], strides = [1, 1]} : vector<8x1536xf32> to vector<8x128xf32>
    %10 = vector.extract_strided_slice %6 {offsets = [0, 1024], sizes = [8, 128], strides = [1, 1]} : vector<8x1536xf32> to vector<8x128xf32>
    %11 = vector.shape_cast %8 : vector<8x128xf32> to vector<1x8x128xf32>
    %12 = vector.shape_cast %9 : vector<8x128xf32> to vector<1x8x128xf32>
    %13 = vector.shape_cast %10 : vector<8x128xf32> to vector<1x8x128xf32>
    "tpu.trace_start"() <{level = 10 : i32, message = "bqd,bkd->bqk"}> : () -> ()
    %cst_7 = arith.constant dense<0.000000e+00> : vector<1x8x8xf32>
    %14 = tpu.matmul %11, %12, %cst_7 {dimension_numbers = #tpu.dot_dimension_numbers<[2], [2], [1], [1], [0, 0, 0, 1, 1, 1], [0], [0]>} : vector<1x8x128xf32>, vector<1x8x128xf32>, vector<1x8x8xf32> -> vector<1x8x8xf32>
    "tpu.trace_stop"() : () -> ()
    %cst_8 = arith.constant dense<0xFF800000> : vector<1x8xf32>
    %15 = vector.multi_reduction <maximumf>, %14, %cst_8 [2] : vector<1x8x8xf32> to vector<1x8xf32>
    %16 = vector.shape_cast %15 : vector<1x8xf32> to vector<1x8x1xf32>
    %17 = vector.broadcast %16 : vector<1x8x1xf32> to vector<1x8x8xf32>
    %18 = arith.subf %14, %17 : vector<1x8x8xf32>
    %19 = math.exp %18 : vector<1x8x8xf32>
    %cst_9 = arith.constant dense<0.000000e+00> : vector<1x8xf32>
    %20 = vector.multi_reduction <add>, %19, %cst_9 [2] : vector<1x8x8xf32> to vector<1x8xf32>
    %21 = vector.shape_cast %20 : vector<1x8xf32> to vector<1x8x1xf32>
    %22 = tpu.reciprocal %21 {approx = true} : vector<1x8x1xf32> -> vector<1x8x1xf32>
    %23 = vector.broadcast %22 : vector<1x8x1xf32> to vector<1x8x8xf32>
    %24 = arith.mulf %19, %23 : vector<1x8x8xf32>
    "tpu.trace_start"() <{level = 10 : i32, message = "bqk,bkd->bqd"}> : () -> ()
    %cst_10 = arith.constant dense<0.000000e+00> : vector<1x8x128xf32>
    %25 = tpu.matmul %24, %13, %cst_10 {dimension_numbers = #tpu.dot_dimension_numbers<[2], [1], [1], [2], [0, 0, 0, 1, 1, 2], [0], [0]>} : vector<1x8x8xf32>, vector<1x8x128xf32>, vector<1x8x128xf32> -> vector<1x8x128xf32>
    "tpu.trace_stop"() : () -> ()
    %26 = vector.shape_cast %25 : vector<1x8x128xf32> to vector<8x128xf32>
    %c0_11 = arith.constant 0 : index
    %c0_12 = arith.constant 0 : index
    %27 = vector.load %arg4[%c0_11, %c0_12] : memref<512x128xf32, #tpu.memory_space<vmem>>, vector<128x128xf32>
    %cst_13 = arith.constant dense<0.000000e+00> : vector<8x128xf32>
    %28 = tpu.matmul %26, %27, %cst_13 {dimension_numbers = #tpu.dot_dimension_numbers<[1], [0], [0], [1], [0, 0, 1, 1], [], []>} : vector<8x128xf32>, vector<128x128xf32>, vector<8x128xf32> -> vector<8x128xf32>
    %29 = arith.addf %7, %28 : vector<8x128xf32>
    %30 = vector.extract_strided_slice %6 {offsets = [0, 128], sizes = [8, 128], strides = [1, 1]} : vector<8x1536xf32> to vector<8x128xf32>
    %31 = vector.extract_strided_slice %6 {offsets = [0, 640], sizes = [8, 128], strides = [1, 1]} : vector<8x1536xf32> to vector<8x128xf32>
    %32 = vector.extract_strided_slice %6 {offsets = [0, 1152], sizes = [8, 128], strides = [1, 1]} : vector<8x1536xf32> to vector<8x128xf32>
    %33 = vector.shape_cast %30 : vector<8x128xf32> to vector<1x8x128xf32>
    %34 = vector.shape_cast %31 : vector<8x128xf32> to vector<1x8x128xf32>
    %35 = vector.shape_cast %32 : vector<8x128xf32> to vector<1x8x128xf32>
    "tpu.trace_start"() <{level = 10 : i32, message = "bqd,bkd->bqk"}> : () -> ()
    %cst_14 = arith.constant dense<0.000000e+00> : vector<1x8x8xf32>
    %36 = tpu.matmul %33, %34, %cst_14 {dimension_numbers = #tpu.dot_dimension_numbers<[2], [2], [1], [1], [0, 0, 0, 1, 1, 1], [0], [0]>} : vector<1x8x128xf32>, vector<1x8x128xf32>, vector<1x8x8xf32> -> vector<1x8x8xf32>
    "tpu.trace_stop"() : () -> ()
    %cst_15 = arith.constant dense<0xFF800000> : vector<1x8xf32>
    %37 = vector.multi_reduction <maximumf>, %36, %cst_15 [2] : vector<1x8x8xf32> to vector<1x8xf32>
    %38 = vector.shape_cast %37 : vector<1x8xf32> to vector<1x8x1xf32>
    %39 = vector.broadcast %38 : vector<1x8x1xf32> to vector<1x8x8xf32>
    %40 = arith.subf %36, %39 : vector<1x8x8xf32>
    %41 = math.exp %40 : vector<1x8x8xf32>
    %cst_16 = arith.constant dense<0.000000e+00> : vector<1x8xf32>
    %42 = vector.multi_reduction <add>, %41, %cst_16 [2] : vector<1x8x8xf32> to vector<1x8xf32>
    %43 = vector.shape_cast %42 : vector<1x8xf32> to vector<1x8x1xf32>
    %44 = tpu.reciprocal %43 {approx = true} : vector<1x8x1xf32> -> vector<1x8x1xf32>
    %45 = vector.broadcast %44 : vector<1x8x1xf32> to vector<1x8x8xf32>
    %46 = arith.mulf %41, %45 : vector<1x8x8xf32>
    "tpu.trace_start"() <{level = 10 : i32, message = "bqk,bkd->bqd"}> : () -> ()
    %cst_17 = arith.constant dense<0.000000e+00> : vector<1x8x128xf32>
    %47 = tpu.matmul %46, %35, %cst_17 {dimension_numbers = #tpu.dot_dimension_numbers<[2], [1], [1], [2], [0, 0, 0, 1, 1, 2], [0], [0]>} : vector<1x8x8xf32>, vector<1x8x128xf32>, vector<1x8x128xf32> -> vector<1x8x128xf32>
    "tpu.trace_stop"() : () -> ()
    %48 = vector.shape_cast %47 : vector<1x8x128xf32> to vector<8x128xf32>
    %c128 = arith.constant 128 : index
    %c0_18 = arith.constant 0 : index
    %49 = vector.load %arg4[%c128, %c0_18] : memref<512x128xf32, #tpu.memory_space<vmem>>, vector<128x128xf32>
    %cst_19 = arith.constant dense<0.000000e+00> : vector<8x128xf32>
    %50 = tpu.matmul %48, %49, %cst_19 {dimension_numbers = #tpu.dot_dimension_numbers<[1], [0], [0], [1], [0, 0, 1, 1], [], []>} : vector<8x128xf32>, vector<128x128xf32>, vector<8x128xf32> -> vector<8x128xf32>
    %51 = arith.addf %29, %50 : vector<8x128xf32>
    %52 = vector.extract_strided_slice %6 {offsets = [0, 256], sizes = [8, 128], strides = [1, 1]} : vector<8x1536xf32> to vector<8x128xf32>
    %53 = vector.extract_strided_slice %6 {offsets = [0, 768], sizes = [8, 128], strides = [1, 1]} : vector<8x1536xf32> to vector<8x128xf32>
    %54 = vector.extract_strided_slice %6 {offsets = [0, 1280], sizes = [8, 128], strides = [1, 1]} : vector<8x1536xf32> to vector<8x128xf32>
    %55 = vector.shape_cast %52 : vector<8x128xf32> to vector<1x8x128xf32>
    %56 = vector.shape_cast %53 : vector<8x128xf32> to vector<1x8x128xf32>
    %57 = vector.shape_cast %54 : vector<8x128xf32> to vector<1x8x128xf32>
    "tpu.trace_start"() <{level = 10 : i32, message = "bqd,bkd->bqk"}> : () -> ()
    %cst_20 = arith.constant dense<0.000000e+00> : vector<1x8x8xf32>
    %58 = tpu.matmul %55, %56, %cst_20 {dimension_numbers = #tpu.dot_dimension_numbers<[2], [2], [1], [1], [0, 0, 0, 1, 1, 1], [0], [0]>} : vector<1x8x128xf32>, vector<1x8x128xf32>, vector<1x8x8xf32> -> vector<1x8x8xf32>
    "tpu.trace_stop"() : () -> ()
    %cst_21 = arith.constant dense<0xFF800000> : vector<1x8xf32>
    %59 = vector.multi_reduction <maximumf>, %58, %cst_21 [2] : vector<1x8x8xf32> to vector<1x8xf32>
    %60 = vector.shape_cast %59 : vector<1x8xf32> to vector<1x8x1xf32>
    %61 = vector.broadcast %60 : vector<1x8x1xf32> to vector<1x8x8xf32>
    %62 = arith.subf %58, %61 : vector<1x8x8xf32>
    %63 = math.exp %62 : vector<1x8x8xf32>
    %cst_22 = arith.constant dense<0.000000e+00> : vector<1x8xf32>
    %64 = vector.multi_reduction <add>, %63, %cst_22 [2] : vector<1x8x8xf32> to vector<1x8xf32>
    %65 = vector.shape_cast %64 : vector<1x8xf32> to vector<1x8x1xf32>
    %66 = tpu.reciprocal %65 {approx = true} : vector<1x8x1xf32> -> vector<1x8x1xf32>
    %67 = vector.broadcast %66 : vector<1x8x1xf32> to vector<1x8x8xf32>
    %68 = arith.mulf %63, %67 : vector<1x8x8xf32>
    "tpu.trace_start"() <{level = 10 : i32, message = "bqk,bkd->bqd"}> : () -> ()
    %cst_23 = arith.constant dense<0.000000e+00> : vector<1x8x128xf32>
    %69 = tpu.matmul %68, %57, %cst_23 {dimension_numbers = #tpu.dot_dimension_numbers<[2], [1], [1], [2], [0, 0, 0, 1, 1, 2], [0], [0]>} : vector<1x8x8xf32>, vector<1x8x128xf32>, vector<1x8x128xf32> -> vector<1x8x128xf32>
    "tpu.trace_stop"() : () -> ()
    %70 = vector.shape_cast %69 : vector<1x8x128xf32> to vector<8x128xf32>
    %c256 = arith.constant 256 : index
    %c0_24 = arith.constant 0 : index
    %71 = vector.load %arg4[%c256, %c0_24] : memref<512x128xf32, #tpu.memory_space<vmem>>, vector<128x128xf32>
    %cst_25 = arith.constant dense<0.000000e+00> : vector<8x128xf32>
    %72 = tpu.matmul %70, %71, %cst_25 {dimension_numbers = #tpu.dot_dimension_numbers<[1], [0], [0], [1], [0, 0, 1, 1], [], []>} : vector<8x128xf32>, vector<128x128xf32>, vector<8x128xf32> -> vector<8x128xf32>
    %73 = arith.addf %51, %72 : vector<8x128xf32>
    %74 = vector.extract_strided_slice %6 {offsets = [0, 384], sizes = [8, 128], strides = [1, 1]} : vector<8x1536xf32> to vector<8x128xf32>
    %75 = vector.extract_strided_slice %6 {offsets = [0, 896], sizes = [8, 128], strides = [1, 1]} : vector<8x1536xf32> to vector<8x128xf32>
    %76 = vector.extract_strided_slice %6 {offsets = [0, 1408], sizes = [8, 128], strides = [1, 1]} : vector<8x1536xf32> to vector<8x128xf32>
    %77 = vector.shape_cast %74 : vector<8x128xf32> to vector<1x8x128xf32>
    %78 = vector.shape_cast %75 : vector<8x128xf32> to vector<1x8x128xf32>
    %79 = vector.shape_cast %76 : vector<8x128xf32> to vector<1x8x128xf32>
    "tpu.trace_start"() <{level = 10 : i32, message = "bqd,bkd->bqk"}> : () -> ()
    %cst_26 = arith.constant dense<0.000000e+00> : vector<1x8x8xf32>
    %80 = tpu.matmul %77, %78, %cst_26 {dimension_numbers = #tpu.dot_dimension_numbers<[2], [2], [1], [1], [0, 0, 0, 1, 1, 1], [0], [0]>} : vector<1x8x128xf32>, vector<1x8x128xf32>, vector<1x8x8xf32> -> vector<1x8x8xf32>
    "tpu.trace_stop"() : () -> ()
    %cst_27 = arith.constant dense<0xFF800000> : vector<1x8xf32>
    %81 = vector.multi_reduction <maximumf>, %80, %cst_27 [2] : vector<1x8x8xf32> to vector<1x8xf32>
    %82 = vector.shape_cast %81 : vector<1x8xf32> to vector<1x8x1xf32>
    %83 = vector.broadcast %82 : vector<1x8x1xf32> to vector<1x8x8xf32>
    %84 = arith.subf %80, %83 : vector<1x8x8xf32>
    %85 = math.exp %84 : vector<1x8x8xf32>
    %cst_28 = arith.constant dense<0.000000e+00> : vector<1x8xf32>
    %86 = vector.multi_reduction <add>, %85, %cst_28 [2] : vector<1x8x8xf32> to vector<1x8xf32>
    %87 = vector.shape_cast %86 : vector<1x8xf32> to vector<1x8x1xf32>
    %88 = tpu.reciprocal %87 {approx = true} : vector<1x8x1xf32> -> vector<1x8x1xf32>
    %89 = vector.broadcast %88 : vector<1x8x1xf32> to vector<1x8x8xf32>
    %90 = arith.mulf %85, %89 : vector<1x8x8xf32>
    "tpu.trace_start"() <{level = 10 : i32, message = "bqk,bkd->bqd"}> : () -> ()
    %cst_29 = arith.constant dense<0.000000e+00> : vector<1x8x128xf32>
    %91 = tpu.matmul %90, %79, %cst_29 {dimension_numbers = #tpu.dot_dimension_numbers<[2], [1], [1], [2], [0, 0, 0, 1, 1, 2], [0], [0]>} : vector<1x8x8xf32>, vector<1x8x128xf32>, vector<1x8x128xf32> -> vector<1x8x128xf32>
    "tpu.trace_stop"() : () -> ()
    %92 = vector.shape_cast %91 : vector<1x8x128xf32> to vector<8x128xf32>
    %c384 = arith.constant 384 : index
    %c0_30 = arith.constant 0 : index
    %93 = vector.load %arg4[%c384, %c0_30] : memref<512x128xf32, #tpu.memory_space<vmem>>, vector<128x128xf32>
    %cst_31 = arith.constant dense<0.000000e+00> : vector<8x128xf32>
    %94 = tpu.matmul %92, %93, %cst_31 {dimension_numbers = #tpu.dot_dimension_numbers<[1], [0], [0], [1], [0, 0, 1, 1], [], []>} : vector<8x128xf32>, vector<128x128xf32>, vector<8x128xf32> -> vector<8x128xf32>
    %95 = arith.addf %73, %94 : vector<8x128xf32>
    %c0_32 = arith.constant 0 : index
    %c0_33 = arith.constant 0 : index
    %96 = vector.load %arg5[%c0_32, %c0_33] : memref<1x128xf32, #tpu.memory_space<vmem>>, vector<1x128xf32>
    %97 = vector.broadcast %96 : vector<1x128xf32> to vector<8x128xf32>
    %98 = arith.addf %95, %97 : vector<8x128xf32>
    %99 = vector.shape_cast %98 : vector<8x128xf32> to vector<1x8x128xf32>
    %c0_34 = arith.constant 0 : index
    %c0_35 = arith.constant 0 : index
    %c0_36 = arith.constant 0 : index
    %100 = vector.load %arg6[%c0_34, %c0_35, %c0_36] : memref<1x8x128xf32, #tpu.memory_space<vmem>>, vector<1x8x128xf32>
    tpu.vector_store %arg6[%c0_34, %c0_35, %c0_36], %99 {strides = array<i32>} : memref<1x8x128xf32, #tpu.memory_space<vmem>>, vector<1x8x128xf32>,
    return
  }
  func.func @transform_0(%arg0: i32) -> (i32, i32, i32) {
    %c0_i32 = arith.constant 0 : i32
    %c0_i32_0 = arith.constant 0 : i32
    %c0_i32_1 = arith.constant 0 : i32
    return %arg0, %c0_i32, %c0_i32_0 : i32, i32, i32
  }
  func.func @transform_1(%arg0: i32) -> (i32, i32) {
    %c0_i32 = arith.constant 0 : i32
    %c0_i32_0 = arith.constant 0 : i32
    %c0_i32_1 = arith.constant 0 : i32
    return %c0_i32, %c0_i32_0 : i32, i32
  }
  func.func @transform_2(%arg0: i32) -> (i32, i32) {
    %c0_i32 = arith.constant 0 : i32
    %c0_i32_0 = arith.constant 0 : i32
    %c0_i32_1 = arith.constant 0 : i32
    return %c0_i32, %c0_i32_0 : i32, i32
  }
  func.func @transform_3(%arg0: i32) -> (i32, i32) {
    %c0_i32 = arith.constant 0 : i32
    %c0_i32_0 = arith.constant 0 : i32
    %c0_i32_1 = arith.constant 0 : i32
    return %c0_i32, %c0_i32_0 : i32, i32
  }
  func.func @transform_4(%arg0: i32) -> (i32, i32) {
    %c0_i32 = arith.constant 0 : i32
    %c0_i32_0 = arith.constant 0 : i32
    %c0_i32_1 = arith.constant 0 : i32
    return %c0_i32, %c0_i32_0 : i32, i32
  }
  func.func @transform_5(%arg0: i32) -> (i32, i32, i32) {
    %c0_i32 = arith.constant 0 : i32
    %c0_i32_0 = arith.constant 0 : i32
    %c0_i32_1 = arith.constant 0 : i32
    return %arg0, %c0_i32, %c0_i32_0 : i32, i32, i32
  }
}

</mosaic_0001>

<llo_original>
// kernel: tpu_custom_call.1
$region0: #{tpu_custom_call.1}
  #allocation0 [shape = 'u32[]', space=smem, size = 0x4, offset = 0x4, fixed_abs, tag = 'smem constant byte address 0x4 - core index']
  #allocation1 [shape = 'u32[144,128]{1,0:T(1,128)}', space=vmem, size = 0x12000, scoped, tag = 'internal scratch']
  %s0 = inlined_call_operand.hbm [shape: f32[2,8,128], index: 0, kind: input, shape index: {}]
  %s1 = inlined_call_operand.hbm [shape: f32[128,1536], index: 1, kind: input, shape index: {}]
  %s2 = inlined_call_operand.hbm [shape: f32[1,1536], index: 2, kind: input, shape index: {}]
  %s3 = inlined_call_operand.hbm [shape: f32[512,128], index: 3, kind: input, shape index: {}]
  %s4 = inlined_call_operand.vmem [shape: f32[1,128], index: 4, kind: input, shape index: {}]
  %s5 = inlined_call_operand.hbm [shape: f32[2,8,128], index: 5, kind: output, shape index: {}]
  %s6 = sld [smem:[#allocation0]]
  $region69: #{tpu_custom_call.1} parent=0
    _
  %s8 = ssub.s32 1, %s6
  %s9 = scalar_select 0, %s8, %s6
  $region1: #{tpu_custom_call.1} parent=0
    #allocation2 [shape = 'u8[8192]{0}', space=vmem, size = 0x2000, scoped, tag = 'input window, operand 0']
    #allocation3 [shape = 's32[2]{0}', space=sflag, size = 0x8, scoped, tag = 'scoped memory for tpu_custom_call.1']
    #allocation4 [shape = 's32[2]{0}', space=sflag, size = 0x8, scoped, tag = 'scoped memory for tpu_custom_call.1']
    #allocation5 [shape = 'u8[786432]{0}', space=vmem, size = 0xc0000, scoped, tag = 'input window, operand 1, single buffered']
    #allocation6 [shape = 's32[1]{0}', space=sflag, size = 0x4, scoped, tag = 'scoped memory for tpu_custom_call.1']
    #allocation7 [shape = 'u8[6144]{0}', space=vmem, size = 0x1800, scoped, tag = 'input window, operand 2, single buffered']
    #allocation8 [shape = 'u8[262144]{0}', space=vmem, size = 0x40000, scoped, tag = 'input window, operand 3, single buffered']
    #allocation9 [shape = 's32[1]{0}', space=sflag, size = 0x4, scoped, tag = 'scoped memory for tpu_custom_call.1']
    #allocation10 [shape = 'u8[8192]{0}', space=vmem, size = 0x2000, scoped, tag = 'output window, operand 0']
    %10 = vsyncpa [#allocation3], 0
    %s11 = scalar_lea.sflag [#allocation3], 1
    %12 = vsyncpa %s11, 0
    %13 = vsyncpa [#allocation6], 0
    %14 = vsyncpa [#allocation9], 0
    %15 = vsyncpa [#allocation4], 0
    %s16 = scalar_lea.sflag [#allocation4], 1
    %17 = vsyncpa %s16, 0
    loop: start=0, step=1, limit=4
    $region2: #{tpu_custom_call.1} parent=1 // loop_pre_header
      _
    $region3: #{tpu_custom_call.1} parent=1 // loop_header
      %s19 = sphi 0, %s23
      %p20 = scmp.ge.s32.totalorder %s19, 4
      %s29 = sphi 0, %s31
      %s32 = sphi 0, %s29
      %s33 = sphi 0, %s32
      %s49 = sphi 0, %s33
      %s53 = sphi 0, %s53
      %s55 = sphi 0, %s53
      %s56 = sphi 0, %s55
      %s70 = sphi 0, %s56
      %s74 = sphi 0, %s74
      %s76 = sphi 0, %s74
      %s77 = sphi 0, %s76
      %s91 = sphi 0, %s77
      %s95 = sphi 0, %s95
      %s97 = sphi 0, %s95
      %s98 = sphi 0, %s97
      %s112 = sphi 0, %s98
      %s116 = sphi 0, %s116
      %s118 = sphi 0, %s116
      %s119 = sphi 0, %s118
      %s133 = sphi 0, %s119
      %s139 = sphi 0, %s141
      %s142 = sphi 0, %s139
      %s143 = sphi 0, %s142
      %s159 = sphi 0, %s143
    $region4: #{tpu_custom_call.1} parent=1 // loop_header_branch
      %22 = sbr.rel (%p20) target = $region8
    $region5: #{tpu_custom_call.1} parent=1 // loop_body
      %s24 = ssub.s32 %s19, 1
      %s25 = ssub.s32 %s19, 2
      %s26 = sadd.s32 %s19, 1
      %s27 = ssub.s32 %s19, %s26
      %p28 = scmp.eq.s32.totalorder %s27, 0
      %s30 = sadd.s32 %s29, 1
      %s31 = scalar_select %p28, %s29, %s30
      %p34 = pneg %p28
      %p35 = scmp.eq.s32.totalorder %s19, 1
      %p36 = por %p34, %p35
      %p37 = scmp.ne.s32.totalorder %s29, %s32
      %p38 = scmp.eq.s32.totalorder %s19, 0
      %p39 = por %p37, %p38
      %p40 = scmp.ne.s32.totalorder %s29, %s32
      %p41 = scmp.eq.s32.totalorder %s24, 1
      %p42 = por %p40, %p41
      %p43 = scmp.ne.s32.totalorder %s32, %s33
      %p44 = scmp.eq.s32.totalorder %s24, 0
      %p45 = por %p43, %p44
      %p46 = scmp.ne.s32.totalorder %s32, %s33
      %p47 = scmp.eq.s32.totalorder %s25, 1
      %p48 = por %p46, %p47
      %p50 = scmp.ne.s32.totalorder %s33, %s49
      %p51 = scmp.eq.s32.totalorder %s25, 0
      %p52 = por %p50, %p51
      %s54 = sadd.s32 %s53, 1
      %p57 = scmp.eq.s32.totalorder %s19, 1
      %p58 = scmp.ne.s32.totalorder %s53, %s55
      %p59 = scmp.eq.s32.totalorder %s19, 0
      %p60 = por %p58, %p59
      %p61 = scmp.ne.s32.totalorder %s53, %s55
      %p62 = scmp.eq.s32.totalorder %s24, 1
      %p63 = por %p61, %p62
      %p64 = scmp.ne.s32.totalorder %s55, %s56
      %p65 = scmp.eq.s32.totalorder %s24, 0
      %p66 = por %p64, %p65
      %p67 = scmp.ne.s32.totalorder %s55, %s56
      %p68 = scmp.eq.s32.totalorder %s25, 1
      %p69 = por %p67, %p68
      %p71 = scmp.ne.s32.totalorder %s56, %s70
      %p72 = scmp.eq.s32.totalorder %s25, 0
      %p73 = por %p71, %p72
      %s75 = sadd.s32 %s74, 1
      %p78 = scmp.eq.s32.totalorder %s19, 1
      %p79 = scmp.ne.s32.totalorder %s74, %s76
      %p80 = scmp.eq.s32.totalorder %s19, 0
      %p81 = por %p79, %p80
      %p82 = scmp.ne.s32.totalorder %s74, %s76
      %p83 = scmp.eq.s32.totalorder %s24, 1
      %p84 = por %p82, %p83
      %p85 = scmp.ne.s32.totalorder %s76, %s77
      %p86 = scmp.eq.s32.totalorder %s24, 0
      %p87 = por %p85, %p86
      %p88 = scmp.ne.s32.totalorder %s76, %s77
      %p89 = scmp.eq.s32.totalorder %s25, 1
      %p90 = por %p88, %p89
      %p92 = scmp.ne.s32.totalorder %s77, %s91
      %p93 = scmp.eq.s32.totalorder %s25, 0
      %p94 = por %p92, %p93
      %s96 = sadd.s32 %s95, 1
      %p99 = scmp.eq.s32.totalorder %s19, 1
      %p100 = scmp.ne.s32.totalorder %s95, %s97
      %p101 = scmp.eq.s32.totalorder %s19, 0
      %p102 = por %p100, %p101
      %p103 = scmp.ne.s32.totalorder %s95, %s97
      %p104 = scmp.eq.s32.totalorder %s24, 1
      %p105 = por %p103, %p104
      %p106 = scmp.ne.s32.totalorder %s97, %s98
      %p107 = scmp.eq.s32.totalorder %s24, 0
      %p108 = por %p106, %p107
      %p109 = scmp.ne.s32.totalorder %s97, %s98
      %p110 = scmp.eq.s32.totalorder %s25, 1
      %p111 = por %p109, %p110
      %p113 = scmp.ne.s32.totalorder %s98, %s112
      %p114 = scmp.eq.s32.totalorder %s25, 0
      %p115 = por %p113, %p114
      %s117 = sadd.s32 %s116, 1
      %p120 = scmp.eq.s32.totalorder %s19, 1
      %p121 = scmp.ne.s32.totalorder %s116, %s118
      %p122 = scmp.eq.s32.totalorder %s19, 0
      %p123 = por %p121, %p122
      %p124 = scmp.ne.s32.totalorder %s116, %s118
      %p125 = scmp.eq.s32.totalorder %s24, 1
      %p126 = por %p124, %p125
      %p127 = scmp.ne.s32.totalorder %s118, %s119
      %p128 = scmp.eq.s32.totalorder %s24, 0
      %p129 = por %p127, %p128
      %p130 = scmp.ne.s32.totalorder %s118, %s119
      %p131 = scmp.eq.s32.totalorder %s25, 1
      %p132 = por %p130, %p131
      %p134 = scmp.ne.s32.totalorder %s119, %s133
      %p135 = scmp.eq.s32.totalorder %s25, 0
      %p136 = por %p134, %p135
      %s137 = ssub.s32 %s19, %s26
      %p138 = scmp.eq.s32.totalorder %s137, 0
      %s140 = sadd.s32 %s139, 1
      %s141 = scalar_select %p138, %s139, %s140
      %p144 = pneg %p138
      %p145 = scmp.eq.s32.totalorder %s19, 1
      %p146 = por %p144, %p145
      %p147 = scmp.ne.s32.totalorder %s139, %s142
      %p148 = scmp.eq.s32.totalorder %s19, 0
      %p149 = por %p147, %p148
      %p150 = scmp.ne.s32.totalorder %s139, %s142
      %p151 = scmp.eq.s32.totalorder %s24, 1
      %p152 = por %p150, %p151
      %p153 = scmp.ne.s32.totalorder %s142, %s143
      %p154 = scmp.eq.s32.totalorder %s24, 0
      %p155 = por %p153, %p154
      %p156 = scmp.ne.s32.totalorder %s142, %s143
      %p157 = scmp.eq.s32.totalorder %s25, 1
      %p158 = por %p156, %p157
      %p160 = scmp.ne.s32.totalorder %s143, %s159
      %p161 = scmp.eq.s32.totalorder %s25, 0
      %p162 = por %p160, %p161
      %p163 = scmp.le.s32.totalorder 1, %s19
      %p164 = scmp.lt.s32.totalorder %s19, 3
      %p165 = pnand %p163, %p164
      %p166 = pneg %p165
      // Predicated region
      $region9: #{tpu_custom_call.1} parent=5 // pred_check
        _
      $region10: #{tpu_custom_call.1} parent=5 // pred_check_branch
        %168 = sbr.rel (%p165) target = $region12
      $region11: #{tpu_custom_call.1} parent=5 // pred_region
        %s169 = ssub.s32 %s19, 1
        // Predicated region
        $region13: #{tpu_custom_call.1} parent=11 // pred_check
          %p170 = pneg %p66
        $region14: #{tpu_custom_call.1} parent=11 // pred_check_branch
          %172 = sbr.rel (%p170) target = $region16
        $region15: #{tpu_custom_call.1} parent=11 // pred_region
          %s174 = ssub.s32 24576, 24576
          %175 = vsyncadd [#allocation6], %s174
          %s176 = sshll.u32 [#allocation5], 4
          %s177 = int_to_ptr.vmem [resolvable:$true] %s176
          %182 = dma.hbm_to_vmem [thread:$0]  %s1, 24576, %s177, [#allocation6], 1536, 1536, 96
        $region16: #{tpu_custom_call.1} parent=11 // pred_fallthru
          _
        // Predicated region
        $region17: #{tpu_custom_call.1} parent=11 // pred_check
          %p183 = pneg %p87
        $region18: #{tpu_custom_call.1} parent=11 // pred_check_branch
          %185 = sbr.rel (%p183) target = $region20
        $region19: #{tpu_custom_call.1} parent=11 // pred_region
          %s187 = ssub.s32 192, 192
          %188 = vsyncadd [#allocation6], %s187
          %s190 = sshll.u32 [#allocation7], 4
          %s191 = int_to_ptr.vmem [resolvable:$true] %s190
          %193 = dma.hbm_to_vmem [thread:$0]  %s2, 192, %s191, [#allocation6]
        $region20: #{tpu_custom_call.1} parent=11 // pred_fallthru
          _
        // Predicated region
        $region21: #{tpu_custom_call.1} parent=11 // pred_check
          %p194 = pneg %p108
        $region22: #{tpu_custom_call.1} parent=11 // pred_check_branch
          %196 = sbr.rel (%p194) target = $region24
        $region23: #{tpu_custom_call.1} parent=11 // pred_region
          %s198 = ssub.s32 8192, 8192
          %199 = vsyncadd [#allocation9], %s198
          %s200 = sshll.u32 [#allocation8], 4
          %s201 = int_to_ptr.vmem [resolvable:$true] %s200
          %206 = dma.hbm_to_vmem [thread:$0]  %s3, 8192, %s201, [#allocation9], 128, 128, 8
        $region24: #{tpu_custom_call.1} parent=11 // pred_fallthru
          _
        // Predicated region
        $region25: #{tpu_custom_call.1} parent=11 // pred_check
          %p207 = pneg %p129
        $region26: #{tpu_custom_call.1} parent=11 // pred_check_branch
          %209 = sbr.rel (%p207) target = $region28
        $region27: #{tpu_custom_call.1} parent=11 // pred_region
          _
        $region28: #{tpu_custom_call.1} parent=11 // pred_fallthru
          _
      $region12: #{tpu_custom_call.1} parent=5 // pred_fallthru
        _
      %p210 = scmp.lt.s32.totalorder %s19, 2
      // Predicated region
      $region29: #{tpu_custom_call.1} parent=5 // pred_check
        %p211 = pneg %p210
      $region30: #{tpu_custom_call.1} parent=5 // pred_check_branch
        %213 = sbr.rel (%p211) target = $region32
      $region31: #{tpu_custom_call.1} parent=5 // pred_region
        // Predicated region
        $region33: #{tpu_custom_call.1} parent=31 // pred_check
          %p214 = pneg %p39
        $region34: #{tpu_custom_call.1} parent=31 // pred_check_branch
          %216 = sbr.rel (%p214) target = $region36
        $region35: #{tpu_custom_call.1} parent=31 // pred_region
          %s217 = sand.u32 %s29, 1
          %s218 = scalar_lea.sflag [#allocation3], %s217
          %s219 = sand.u32 %s29, 1
          %s220 = smul.addr %s219, 8
          %s221 = scalar_lea.vmem [#allocation2], %s220
          %s223 = ssub.s32 128, 128
          %224 = vsyncadd %s218, %s223
          %s225 = smul.addr %s19, 128
          %s226 = scalar_lea.hbm %s0, %s225
          %s228 = sshll.u32 %s221, 4
          %s229 = int_to_ptr.vmem [resolvable:$true] %s228
          %231 = dma.hbm_to_vmem [thread:$0]  %s226, 128, %s229, %s218
        $region36: #{tpu_custom_call.1} parent=31 // pred_fallthru
          _
      $region32: #{tpu_custom_call.1} parent=5 // pred_fallthru
        _
      %p232 = scmp.le.s32.totalorder 1, %s19
      %p233 = scmp.lt.s32.totalorder %s19, 3
      %p234 = pnand %p232, %p233
      %p235 = pneg %p234
      // Predicated region
      $region37: #{tpu_custom_call.1} parent=5 // pred_check
        _
      $region38: #{tpu_custom_call.1} parent=5 // pred_check_branch
        %237 = sbr.rel (%p234) target = $region40
      $region39: #{tpu_custom_call.1} parent=5 // pred_region
        %s238 = ssub.s32 %s19, 1
        %s239 = sand.u32 %s32, 1
        %s240 = scalar_lea.sflag [#allocation3], %s239
        %s241 = sand.u32 %s32, 1
        %s242 = smul.addr %s241, 8
        %s243 = scalar_lea.vmem [#allocation2], %s242
        // Predicated region
        $region41: #{tpu_custom_call.1} parent=39 // pred_check
          %p244 = pneg %p45
        $region42: #{tpu_custom_call.1} parent=39 // pred_check_branch
          %246 = sbr.rel (%p244) target = $region44
        $region43: #{tpu_custom_call.1} parent=39 // pred_region
          %247 = dma.done %s240, 128
        $region44: #{tpu_custom_call.1} parent=39 // pred_fallthru
          _
        // Predicated region
        $region45: #{tpu_custom_call.1} parent=39 // pred_check
          %p248 = pneg %p66
        $region46: #{tpu_custom_call.1} parent=39 // pred_check_branch
          %250 = sbr.rel (%p248) target = $region48
        $region47: #{tpu_custom_call.1} parent=39 // pred_region
          %251 = dma.done [#allocation6], 24576
        $region48: #{tpu_custom_call.1} parent=39 // pred_fallthru
          _
        // Predicated region
        $region49: #{tpu_custom_call.1} parent=39 // pred_check
          %p252 = pneg %p87
        $region50: #{tpu_custom_call.1} parent=39 // pred_check_branch
          %254 = sbr.rel (%p252) target = $region52
        $region51: #{tpu_custom_call.1} parent=39 // pred_region
          %255 = dma.done [#allocation6], 192
        $region52: #{tpu_custom_call.1} parent=39 // pred_fallthru
          _
        // Predicated region
        $region53: #{tpu_custom_call.1} parent=39 // pred_check
          %p256 = pneg %p108
        $region54: #{tpu_custom_call.1} parent=39 // pred_check_branch
          %258 = sbr.rel (%p256) target = $region56
        $region55: #{tpu_custom_call.1} parent=39 // pred_region
          %259 = dma.done [#allocation9], 8192
        $region56: #{tpu_custom_call.1} parent=39 // pred_fallthru
          _
        %s260 = sand.u32 %s32, 1
        %s261 = scalar_lea.sflag [#allocation3], %s260
        %s262 = sand.u32 %s32, 1
        %s263 = smul.addr %s262, 8
        %s264 = scalar_lea.vmem [#allocation2], %s263
        %p265 = pneg %p45
        %p266 = pneg %p42
        %p267 = pneg %p66
        %p268 = pneg %p63
        %p269 = pneg %p87
        %p270 = pneg %p84
        %p271 = pneg %p108
        %p272 = pneg %p105
        %p273 = pneg %p129
        %p274 = pneg %p126
        %p275 = pneg %p155
        %p276 = pneg %p152
        %s277 = sand.u32 %s142, 1
        %s278 = scalar_lea.sflag [#allocation4], %s277
        %s279 = sand.u32 %s142, 1
        %s280 = smul.addr %s279, 8
        %s281 = scalar_lea.vmem [#allocation10], %s280
        %v282 = vld [vmem:[%s243] sm:$0xff]
        %v283 = vld [vmem:[#allocation5] sm:$0xff]
        %v284 = vld [vmem:[#allocation5 + $0x8] sm:$0xff]
        %v285 = vld [vmem:[#allocation5 + $0x10] sm:$0xff]
        %v286 = vld [vmem:[#allocation5 + $0x18] sm:$0xff]
        %v287 = vld [vmem:[#allocation5 + $0x20] sm:$0xff]
        %v288 = vld [vmem:[#allocation5 + $0x28] sm:$0xff]
        %v289 = vld [vmem:[#allocation5 + $0x30] sm:$0xff]
        %v290 = vld [vmem:[#allocation5 + $0x38] sm:$0xff]
        %v291 = vld [vmem:[#allocation5 + $0x40] sm:$0xff]
        %v292 = vld [vmem:[#allocation5 + $0x48] sm:$0xff]
        %v293 = vld [vmem:[#allocation5 + $0x50] sm:$0xff]
        %v294 = vld [vmem:[#allocation5 + $0x58] sm:$0xff]
        %v295 = vld [vmem:[#allocation5 + $0x60] sm:$0xff]
        %v296 = vld [vmem:[#allocation5 + $0x68] sm:$0xff]
        %v297 = vld [vmem:[#allocation5 + $0x70] sm:$0xff]
        %v298 = vld [vmem:[#allocation5 + $0x78] sm:$0xff]
        %v299 = vld [vmem:[#allocation5 + $0x80] sm:$0xff]
        %v300 = vld [vmem:[#allocation5 + $0x88] sm:$0xff]
        %v301 = vld [vmem:[#allocation5 + $0x90] sm:$0xff]
        %v302 = vld [vmem:[#allocation5 + $0x98] sm:$0xff]
        %v303 = vld [vmem:[#allocation5 + $0xa0] sm:$0xff]
        %v304 = vld [vmem:[#allocation5 + $0xa8] sm:$0xff]
        %v305 = vld [vmem:[#allocation5 + $0xb0] sm:$0xff]
        %v306 = vld [vmem:[#allocation5 + $0xb8] sm:$0xff]
        %v307 = vld [vmem:[#allocation5 + $0xc0] sm:$0xff]
        %v308 = vld [vmem:[#allocation5 + $0xc8] sm:$0xff]
        %v309 = vld [vmem:[#allocation5 + $0xd0] sm:$0xff]
        %v310 = vld [vmem:[#allocation5 + $0xd8] sm:$0xff]
        %v311 = vld [vmem:[#allocation5 + $0xe0] sm:$0xff]
        %v312 = vld [vmem:[#allocation5 + $0xe8] sm:$0xff]
        %v313 = vld [vmem:[#allocation5 + $0xf0] sm:$0xff]
        %v314 = vld [vmem:[#allocation5 + $0xf8] sm:$0xff]
        %v315 = vld [vmem:[#allocation5 + $0x100] sm:$0xff]
        %v316 = vld [vmem:[#allocation5 + $0x108] sm:$0xff]
        %v317 = vld [vmem:[#allocation5 + $0x110] sm:$0xff]
        %v318 = vld [vmem:[#allocation5 + $0x118] sm:$0xff]
        %v319 = vld [vmem:[#allocation5 + $0x120] sm:$0xff]
        %v320 = vld [vmem:[#allocation5 + $0x128] sm:$0xff]
        %v321 = vld [vmem:[#allocation5 + $0x130] sm:$0xff]
        %v322 = vld [vmem:[#allocation5 + $0x138] sm:$0xff]
        %v323 = vld [vmem:[#allocation5 + $0x140] sm:$0xff]
        %v324 = vld [vmem:[#allocation5 + $0x148] sm:$0xff]
        %v325 = vld [vmem:[#allocation5 + $0x150] sm:$0xff]
        %v326 = vld [vmem:[#allocation5 + $0x158] sm:$0xff]
        %v327 = vld [vmem:[#allocation5 + $0x160] sm:$0xff]
        %v328 = vld [vmem:[#allocation5 + $0x168] sm:$0xff]
        %v329 = vld [vmem:[#allocation5 + $0x170] sm:$0xff]
        %v330 = vld [vmem:[#allocation5 + $0x178] sm:$0xff]
        %v331 = vld [vmem:[#allocation5 + $0x180] sm:$0xff]
        %v332 = vld [vmem:[#allocation5 + $0x188] sm:$0xff]
        %v333 = vld [vmem:[#allocation5 + $0x190] sm:$0xff]
        %v334 = vld [vmem:[#allocation5 + $0x198] sm:$0xff]
        %v335 = vld [vmem:[#allocation5 + $0x1a0] sm:$0xff]
        %v336 = vld [vmem:[#allocation5 + $0x1a8] sm:$0xff]
        %v337 = vld [vmem:[#allocation5 + $0x1b0] sm:$0xff]
        %v338 = vld [vmem:[#allocation5 + $0x1b8] sm:$0xff]
        %v339 = vld [vmem:[#allocation5 + $0x1c0] sm:$0xff]
        %v340 = vld [vmem:[#allocation5 + $0x1c8] sm:$0xff]
        %v341 = vld [vmem:[#allocation5 + $0x1d0] sm:$0xff]
        %v342 = vld [vmem:[#allocation5 + $0x1d8] sm:$0xff]
        %v343 = vld [vmem:[#allocation5 + $0x1e0] sm:$0xff]
        %v344 = vld [vmem:[#allocation5 + $0x1e8] sm:$0xff]
        %v345 = vld [vmem:[#allocation5 + $0x1f0] sm:$0xff]
        %v346 = vld [vmem:[#allocation5 + $0x1f8] sm:$0xff]
        %v347 = vld [vmem:[#allocation5 + $0x200] sm:$0xff]
        %v348 = vld [vmem:[#allocation5 + $0x208] sm:$0xff]
        %v349 = vld [vmem:[#allocation5 + $0x210] sm:$0xff]
        %v350 = vld [vmem:[#allocation5 + $0x218] sm:$0xff]
        %v351 = vld [vmem:[#allocation5 + $0x220] sm:$0xff]
        %v352 = vld [vmem:[#allocation5 + $0x228] sm:$0xff]
        %v353 = vld [vmem:[#allocation5 + $0x230] sm:$0xff]
        %v354 = vld [vmem:[#allocation5 + $0x238] sm:$0xff]
        %v355 = vld [vmem:[#allocation5 + $0x240] sm:$0xff]
        %v356 = vld [vmem:[#allocation5 + $0x248] sm:$0xff]
        %v357 = vld [vmem:[#allocation5 + $0x250] sm:$0xff]
        %v358 = vld [vmem:[#allocation5 + $0x258] sm:$0xff]
        %v359 = vld [vmem:[#allocation5 + $0x260] sm:$0xff]
        %v360 = vld [vmem:[#allocation5 + $0x268] sm:$0xff]
        %v361 = vld [vmem:[#allocation5 + $0x270] sm:$0xff]
        %v362 = vld [vmem:[#allocation5 + $0x278] sm:$0xff]
        %v363 = vld [vmem:[#allocation5 + $0x280] sm:$0xff]
        %v364 = vld [vmem:[#allocation5 + $0x288] sm:$0xff]
        %v365 = vld [vmem:[#allocation5 + $0x290] sm:$0xff]
        %v366 = vld [vmem:[#allocation5 + $0x298] sm:$0xff]
        %v367 = vld [vmem:[#allocation5 + $0x2a0] sm:$0xff]
        %v368 = vld [vmem:[#allocation5 + $0x2a8] sm:$0xff]
        %v369 = vld [vmem:[#allocation5 + $0x2b0] sm:$0xff]
        %v370 = vld [vmem:[#allocation5 + $0x2b8] sm:$0xff]
        %v371 = vld [vmem:[#allocation5 + $0x2c0] sm:$0xff]
        %v372 = vld [vmem:[#allocation5 + $0x2c8] sm:$0xff]
        %v373 = vld [vmem:[#allocation5 + $0x2d0] sm:$0xff]
        %v374 = vld [vmem:[#allocation5 + $0x2d8] sm:$0xff]
        %v375 = vld [vmem:[#allocation5 + $0x2e0] sm:$0xff]
        %v376 = vld [vmem:[#allocation5 + $0x2e8] sm:$0xff]
        %v377 = vld [vmem:[#allocation5 + $0x2f0] sm:$0xff]
        %v378 = vld [vmem:[#allocation5 + $0x2f8] sm:$0xff]
        %v379 = vld [vmem:[#allocation5 + $0x300] sm:$0xff]
        %v380 = vld [vmem:[#allocation5 + $0x308] sm:$0xff]
        %v381 = vld [vmem:[#allocation5 + $0x310] sm:$0xff]
        %v382 = vld [vmem:[#allocation5 + $0x318] sm:$0xff]
        %v383 = vld [vmem:[#allocation5 + $0x320] sm:$0xff]
        %v384 = vld [vmem:[#allocation5 + $0x328] sm:$0xff]
        %v385 = vld [vmem:[#allocation5 + $0x330] sm:$0xff]
        %v386 = vld [vmem:[#allocation5 + $0x338] sm:$0xff]
        %v387 = vld [vmem:[#allocation5 + $0x340] sm:$0xff]
        %v388 = vld [vmem:[#allocation5 + $0x348] sm:$0xff]
        %v389 = vld [vmem:[#allocation5 + $0x350] sm:$0xff]
        %v390 = vld [vmem:[#allocation5 + $0x358] sm:$0xff]
        %v391 = vld [vmem:[#allocation5 + $0x360] sm:$0xff]
        %v392 = vld [vmem:[#allocation5 + $0x368] sm:$0xff]
        %v393 = vld [vmem:[#allocation5 + $0x370] sm:$0xff]
        %v394 = vld [vmem:[#allocation5 + $0x378] sm:$0xff]
        %v395 = vld [vmem:[#allocation5 + $0x380] sm:$0xff]
        %v396 = vld [vmem:[#allocation5 + $0x388] sm:$0xff]
        %v397 = vld [vmem:[#allocation5 + $0x390] sm:$0xff]
        %v398 = vld [vmem:[#allocation5 + $0x398] sm:$0xff]
        %v399 = vld [vmem:[#allocation5 + $0x3a0] sm:$0xff]
        %v400 = vld [vmem:[#allocation5 + $0x3a8] sm:$0xff]
        %v401 = vld [vmem:[#allocation5 + $0x3b0] sm:$0xff]
        %v402 = vld [vmem:[#allocation5 + $0x3b8] sm:$0xff]
        %v403 = vld [vmem:[#allocation5 + $0x3c0] sm:$0xff]
        %v404 = vld [vmem:[#allocation5 + $0x3c8] sm:$0xff]
        %v405 = vld [vmem:[#allocation5 + $0x3d0] sm:$0xff]
        %v406 = vld [vmem:[#allocation5 + $0x3d8] sm:$0xff]
        %v407 = vld [vmem:[#allocation5 + $0x3e0] sm:$0xff]
        %v408 = vld [vmem:[#allocation5 + $0x3e8] sm:$0xff]
        %v409 = vld [vmem:[#allocation5 + $0x3f0] sm:$0xff]
        %v410 = vld [vmem:[#allocation5 + $0x3f8] sm:$0xff]
        %v411 = vld [vmem:[#allocation5 + $0x400] sm:$0xff]
        %v412 = vld [vmem:[#allocation5 + $0x408] sm:$0xff]
        %v413 = vld [vmem:[#allocation5 + $0x410] sm:$0xff]
        %v414 = vld [vmem:[#allocation5 + $0x418] sm:$0xff]
        %v415 = vld [vmem:[#allocation5 + $0x420] sm:$0xff]
        %v416 = vld [vmem:[#allocation5 + $0x428] sm:$0xff]
        %v417 = vld [vmem:[#allocation5 + $0x430] sm:$0xff]
        %v418 = vld [vmem:[#allocation5 + $0x438] sm:$0xff]
        %v419 = vld [vmem:[#allocation5 + $0x440] sm:$0xff]
        %v420 = vld [vmem:[#allocation5 + $0x448] sm:$0xff]
        %v421 = vld [vmem:[#allocation5 + $0x450] sm:$0xff]
        %v422 = vld [vmem:[#allocation5 + $0x458] sm:$0xff]
        %v423 = vld [vmem:[#allocation5 + $0x460] sm:$0xff]
        %v424 = vld [vmem:[#allocation5 + $0x468] sm:$0xff]
        %v425 = vld [vmem:[#allocation5 + $0x470] sm:$0xff]
        %v426 = vld [vmem:[#allocation5 + $0x478] sm:$0xff]
        %v427 = vld [vmem:[#allocation5 + $0x480] sm:$0xff]
        %v428 = vld [vmem:[#allocation5 + $0x488] sm:$0xff]
        %v429 = vld [vmem:[#allocation5 + $0x490] sm:$0xff]
        %v430 = vld [vmem:[#allocation5 + $0x498] sm:$0xff]
        %v431 = vld [vmem:[#allocation5 + $0x4a0] sm:$0xff]
        %v432 = vld [vmem:[#allocation5 + $0x4a8] sm:$0xff]
        %v433 = vld [vmem:[#allocation5 + $0x4b0] sm:$0xff]
        %v434 = vld [vmem:[#allocation5 + $0x4b8] sm:$0xff]
        %v435 = vld [vmem:[#allocation5 + $0x4c0] sm:$0xff]
        %v436 = vld [vmem:[#allocation5 + $0x4c8] sm:$0xff]
        %v437 = vld [vmem:[#allocation5 + $0x4d0] sm:$0xff]
        %v438 = vld [vmem:[#allocation5 + $0x4d8] sm:$0xff]
        %v439 = vld [vmem:[#allocation5 + $0x4e0] sm:$0xff]
        %v440 = vld [vmem:[#allocation5 + $0x4e8] sm:$0xff]
        %v441 = vld [vmem:[#allocation5 + $0x4f0] sm:$0xff]
        %v442 = vld [vmem:[#allocation5 + $0x4f8] sm:$0xff]
        %v443 = vld [vmem:[#allocation5 + $0x500] sm:$0xff]
        %v444 = vld [vmem:[#allocation5 + $0x508] sm:$0xff]
        %v445 = vld [vmem:[#allocation5 + $0x510] sm:$0xff]
        %v446 = vld [vmem:[#allocation5 + $0x518] sm:$0xff]
        %v447 = vld [vmem:[#allocation5 + $0x520] sm:$0xff]
        %v448 = vld [vmem:[#allocation5 + $0x528] sm:$0xff]
        %v449 = vld [vmem:[#allocation5 + $0x530] sm:$0xff]
        %v450 = vld [vmem:[#allocation5 + $0x538] sm:$0xff]
        %v451 = vld [vmem:[#allocation5 + $0x540] sm:$0xff]
        %v452 = vld [vmem:[#allocation5 + $0x548] sm:$0xff]
        %v453 = vld [vmem:[#allocation5 + $0x550] sm:$0xff]
        %v454 = vld [vmem:[#allocation5 + $0x558] sm:$0xff]
        %v455 = vld [vmem:[#allocation5 + $0x560] sm:$0xff]
        %v456 = vld [vmem:[#allocation5 + $0x568] sm:$0xff]
        %v457 = vld [vmem:[#allocation5 + $0x570] sm:$0xff]
        %v458 = vld [vmem:[#allocation5 + $0x578] sm:$0xff]
        %v459 = vld [vmem:[#allocation5 + $0x580] sm:$0xff]
        %v460 = vld [vmem:[#allocation5 + $0x588] sm:$0xff]
        %v461 = vld [vmem:[#allocation5 + $0x590] sm:$0xff]
        %v462 = vld [vmem:[#allocation5 + $0x598] sm:$0xff]
        %v463 = vld [vmem:[#allocation5 + $0x5a0] sm:$0xff]
        %v464 = vld [vmem:[#allocation5 + $0x5a8] sm:$0xff]
        %v465 = vld [vmem:[#allocation5 + $0x5b0] sm:$0xff]
        %v466 = vld [vmem:[#allocation5 + $0x5b8] sm:$0xff]
        %v467 = vld [vmem:[#allocation5 + $0x5c0] sm:$0xff]
        %v468 = vld [vmem:[#allocation5 + $0x5c8] sm:$0xff]
        %v469 = vld [vmem:[#allocation5 + $0x5d0] sm:$0xff]
        %v470 = vld [vmem:[#allocation5 + $0x5d8] sm:$0xff]
        %v471 = vld [vmem:[#allocation5 + $0x5e0] sm:$0xff]
        %v472 = vld [vmem:[#allocation5 + $0x5e8] sm:$0xff]
        %v473 = vld [vmem:[#allocation5 + $0x5f0] sm:$0xff]
        %v474 = vld [vmem:[#allocation5 + $0x5f8] sm:$0xff]
        %v475 = vld [vmem:[#allocation7] sm:$0xff]
        %v476 = vld [vmem:[#allocation7 + $0x8] sm:$0xf]
        %v479 = vlaneseq
        %v480 = vshrl.u32 %v479, 7
        %v481 = vsub.s32 0, %v480
        %v482 = vrot.slane %v475, %v481
        %v483 = vlaneseq
        %v484 = vshrl.u32 %v483, 7
        %v485 = vsub.s32 1, %v484
        %v486 = vrot.slane %v475, %v485
        %v487 = vlaneseq
        %v488 = vshrl.u32 %v487, 7
        %v489 = vsub.s32 2, %v488
        %v490 = vrot.slane %v475, %v489
        %v491 = vlaneseq
        %v492 = vshrl.u32 %v491, 7
        %v493 = vsub.s32 3, %v492
        %v494 = vrot.slane %v475, %v493
        %v495 = vlaneseq
        %v496 = vshrl.u32 %v495, 7
        %v497 = vsub.s32 4, %v496
        %v498 = vrot.slane %v475, %v497
        %v499 = vlaneseq
        %v500 = vshrl.u32 %v499, 7
        %v501 = vsub.s32 5, %v500
        %v502 = vrot.slane %v475, %v501
        %v503 = vlaneseq
        %v504 = vshrl.u32 %v503, 7
        %v505 = vsub.s32 6, %v504
        %v506 = vrot.slane %v475, %v505
        %v507 = vlaneseq
        %v508 = vshrl.u32 %v507, 7
        %v509 = vsub.s32 7, %v508
        %v510 = vrot.slane %v475, %v509
        %v511 = vlaneseq
        %v512 = vshrl.u32 %v511, 7
        %v513 = vsub.s32 0, %v512
        %v514 = vrot.slane %v476, %v513
        %v515 = vlaneseq
        %v516 = vshrl.u32 %v515, 7
        %v517 = vsub.s32 1, %v516
        %v518 = vrot.slane %v476, %v517
        %v519 = vlaneseq
        %v520 = vshrl.u32 %v519, 7
        %v521 = vsub.s32 2, %v520
        %v522 = vrot.slane %v476, %v521
        %v523 = vlaneseq
        %v524 = vshrl.u32 %v523, 7
        %v525 = vsub.s32 3, %v524
        %v526 = vrot.slane %v476, %v525
        %539 = vmatprep.subr.mxu0 %v284
        %540 = vmatpush1.msra.mxu0 %v283
        %541 = vmatprep.subr.mxu0 %v296
        %542 = vmatpush1.msra.mxu0 %v295
        %543 = vmatprep.subr.mxu0 %v308
        %544 = vmatpush1.msra.mxu0 %v307
        %545 = vmatprep.subr.mxu0 %v320
        %546 = vmatpush1.msra.mxu0 %v319
        %547 = vmatprep.subr.mxu0 %v332
        %548 = vmatpush1.msra.mxu0 %v331
        %549 = vmatprep.subr.mxu0 %v344
        %550 = vmatpush1.msra.mxu0 %v343
        %551 = vmatprep.subr.mxu0 %v356
        %552 = vmatpush1.msra.mxu0 %v355
        %553 = vmatprep.subr.mxu0 %v368
        %554 = vmatpush1.msra.mxu0 %v367
        %555 = vmatprep.subr.mxu0 %v380
        %556 = vmatpush1.msra.mxu0 %v379
        %557 = vmatprep.subr.mxu0 %v392
        %558 = vmatpush1.msra.mxu0 %v391
        %559 = vmatprep.subr.mxu0 %v404
        %560 = vmatpush1.msra.mxu0 %v403
        %561 = vmatprep.subr.mxu0 %v416
        %562 = vmatpush1.msra.mxu0 %v415
        %563 = vmatprep.subr.mxu0 %v428
        %564 = vmatpush1.msra.mxu0 %v427
        %565 = vmatprep.subr.mxu0 %v440
        %566 = vmatpush1.msra.mxu0 %v439
        %567 = vmatprep.subr.mxu0 %v452
        %568 = vmatpush1.msra.mxu0 %v451
        %569 = vmatprep.subr.mxu0 %v464
        %570 = vmatpush1.msra.mxu0 %v463
        %571 = vmatprep.subr.mxu0 0.0
        %572 = vmatpush1.msra.mxu0 0.0
        %573 = vmatprep.subr.mxu0 0.0
        %574 = vmatpush1.msra.mxu0 0.0
        %575 = vmatprep.subr.mxu0 0.0
        %576 = vmatpush1.msra.mxu0 0.0
        %577 = vmatprep.subr.mxu0 0.0
        %578 = vmatpush1.msra.mxu0 0.0
        %579 = vmatprep.subr.mxu0 0.0
        %580 = vmatpush1.msra.mxu0 0.0
        %581 = vmatprep.subr.mxu0 0.0
        %582 = vmatpush1.msra.mxu0 0.0
        %583 = vmatprep.subr.mxu0 0.0
        %584 = vmatpush1.msra.mxu0 0.0
        %585 = vmatprep.subr.mxu0 0.0
        %586 = vmatpush1.msra.mxu0 0.0
        %587 = vmatprep.subr.mxu0 0.0
        %588 = vmatpush1.msra.mxu0 0.0
        %589 = vmatprep.subr.mxu0 0.0
        %590 = vmatpush1.msra.mxu0 0.0
        %591 = vmatprep.subr.mxu0 0.0
        %592 = vmatpush1.msra.mxu0 0.0
        %593 = vmatprep.subr.mxu0 0.0
        %594 = vmatpush1.msra.mxu0 0.0
        %595 = vmatprep.subr.mxu0 0.0
        %596 = vmatpush1.msra.mxu0 0.0
        %597 = vmatprep.subr.mxu0 0.0
        %598 = vmatpush1.msra.mxu0 0.0
        %599 = vmatprep.subr.mxu0 0.0
        %600 = vmatpush1.msra.mxu0 0.0
        %601 = vmatprep.subr.mxu0 0.0
        %602 = vmatpush1.msra.mxu0 0.0
        %603 = vmatprep.mubr.f32.mxu0 0.0
        %604 = vmatmul.mubr.f32.gmra.mrb[0].mxu0 %v282
        %v605 = vpop.f32.mrb[0].mxu0
        %v606 = vadd.f32 %v482, %v605
        %v607 = vpop.f32.mrb[0].mxu0
        %v608 = vadd.f32 %v486, %v607
        %609 = vdwg.mxu0
        %610 = vmatprep.subr.mxu0 %v286
        %611 = vmatpush1.msra.mxu0 %v285
        %612 = vmatprep.subr.mxu0 %v298
        %613 = vmatpush1.msra.mxu0 %v297
        %614 = vmatprep.subr.mxu0 %v310
        %615 = vmatpush1.msra.mxu0 %v309
        %616 = vmatprep.subr.mxu0 %v322
        %617 = vmatpush1.msra.mxu0 %v321
        %618 = vmatprep.subr.mxu0 %v334
        %619 = vmatpush1.msra.mxu0 %v333
        %620 = vmatprep.subr.mxu0 %v346
        %621 = vmatpush1.msra.mxu0 %v345
        %622 = vmatprep.subr.mxu0 %v358
        %623 = vmatpush1.msra.mxu0 %v357
        %624 = vmatprep.subr.mxu0 %v370
        %625 = vmatpush1.msra.mxu0 %v369
        %626 = vmatprep.subr.mxu0 %v382
        %627 = vmatpush1.msra.mxu0 %v381
        %628 = vmatprep.subr.mxu0 %v394
        %629 = vmatpush1.msra.mxu0 %v393
        %630 = vmatprep.subr.mxu0 %v406
        %631 = vmatpush1.msra.mxu0 %v405
        %632 = vmatprep.subr.mxu0 %v418
        %633 = vmatpush1.msra.mxu0 %v417
        %634 = vmatprep.subr.mxu0 %v430
        %635 = vmatpush1.msra.mxu0 %v429
        %636 = vmatprep.subr.mxu0 %v442
        %637 = vmatpush1.msra.mxu0 %v441
        %638 = vmatprep.subr.mxu0 %v454
        %639 = vmatpush1.msra.mxu0 %v453
        %640 = vmatprep.subr.mxu0 %v466
        %641 = vmatpush1.msra.mxu0 %v465
        %642 = vmatprep.subr.mxu0 0.0
        %643 = vmatpush1.msra.mxu0 0.0
        %644 = vmatprep.subr.mxu0 0.0
        %645 = vmatpush1.msra.mxu0 0.0
        %646 = vmatprep.subr.mxu0 0.0
        %647 = vmatpush1.msra.mxu0 0.0
        %648 = vmatprep.subr.mxu0 0.0
        %649 = vmatpush1.msra.mxu0 0.0
        %650 = vmatprep.subr.mxu0 0.0
        %651 = vmatpush1.msra.mxu0 0.0
        %652 = vmatprep.subr.mxu0 0.0
        %653 = vmatpush1.msra.mxu0 0.0
        %654 = vmatprep.subr.mxu0 0.0
        %655 = vmatpush1.msra.mxu0 0.0
        %656 = vmatprep.subr.mxu0 0.0
        %657 = vmatpush1.msra.mxu0 0.0
        %658 = vmatprep.subr.mxu0 0.0
        %659 = vmatpush1.msra.mxu0 0.0
        %660 = vmatprep.subr.mxu0 0.0
        %661 = vmatpush1.msra.mxu0 0.0
        %662 = vmatprep.subr.mxu0 0.0
        %663 = vmatpush1.msra.mxu0 0.0
        %664 = vmatprep.subr.mxu0 0.0
        %665 = vmatpush1.msra.mxu0 0.0
        %666 = vmatprep.subr.mxu0 0.0
        %667 = vmatpush1.msra.mxu0 0.0
        %668 = vmatprep.subr.mxu0 0.0
        %669 = vmatpush1.msra.mxu0 0.0
        %670 = vmatprep.subr.mxu0 0.0
        %671 = vmatpush1.msra.mxu0 0.0
        %672 = vmatprep.subr.mxu0 0.0
        %673 = vmatpush1.msra.mxu0 0.0
        %674 = vmatprep.mubr.f32.mxu0 0.0
        %675 = vmatmul.mubr.f32.gmra.mrb[0].mxu0 %v282
        %v676 = vpop.f32.mrb[0].mxu0
        %v677 = vadd.f32 %v490, %v676
        %v678 = vpop.f32.mrb[0].mxu0
        %v679 = vadd.f32 %v494, %v678
        %680 = vdwg.mxu0
        %681 = vmatprep.subr.mxu0 %v288
        %682 = vmatpush1.msra.mxu0 %v287
        %683 = vmatprep.subr.mxu0 %v300
        %684 = vmatpush1.msra.mxu0 %v299
        %685 = vmatprep.subr.mxu0 %v312
        %686 = vmatpush1.msra.mxu0 %v311
        %687 = vmatprep.subr.mxu0 %v324
        %688 = vmatpush1.msra.mxu0 %v323
        %689 = vmatprep.subr.mxu0 %v336
        %690 = vmatpush1.msra.mxu0 %v335
        %691 = vmatprep.subr.mxu0 %v348
        %692 = vmatpush1.msra.mxu0 %v347
        %693 = vmatprep.subr.mxu0 %v360
        %694 = vmatpush1.msra.mxu0 %v359
        %695 = vmatprep.subr.mxu0 %v372
        %696 = vmatpush1.msra.mxu0 %v371
        %697 = vmatprep.subr.mxu0 %v384
        %698 = vmatpush1.msra.mxu0 %v383
        %699 = vmatprep.subr.mxu0 %v396
        %700 = vmatpush1.msra.mxu0 %v395
        %701 = vmatprep.subr.mxu0 %v408
        %702 = vmatpush1.msra.mxu0 %v407
        %703 = vmatprep.subr.mxu0 %v420
        %704 = vmatpush1.msra.mxu0 %v419
        %705 = vmatprep.subr.mxu0 %v432
        %706 = vmatpush1.msra.mxu0 %v431
        %707 = vmatprep.subr.mxu0 %v444
        %708 = vmatpush1.msra.mxu0 %v443
        %709 = vmatprep.subr.mxu0 %v456
        %710 = vmatpush1.msra.mxu0 %v455
        %711 = vmatprep.subr.mxu0 %v468
        %712 = vmatpush1.msra.mxu0 %v467
        %713 = vmatprep.subr.mxu0 0.0
        %714 = vmatpush1.msra.mxu0 0.0
        %715 = vmatprep.subr.mxu0 0.0
        %716 = vmatpush1.msra.mxu0 0.0
        %717 = vmatprep.subr.mxu0 0.0
        %718 = vmatpush1.msra.mxu0 0.0
        %719 = vmatprep.subr.mxu0 0.0
        %720 = vmatpush1.msra.mxu0 0.0
        %721 = vmatprep.subr.mxu0 0.0
        %722 = vmatpush1.msra.mxu0 0.0
        %723 = vmatprep.subr.mxu0 0.0
        %724 = vmatpush1.msra.mxu0 0.0
        %725 = vmatprep.subr.mxu0 0.0
        %726 = vmatpush1.msra.mxu0 0.0
        %727 = vmatprep.subr.mxu0 0.0
        %728 = vmatpush1.msra.mxu0 0.0
        %729 = vmatprep.subr.mxu0 0.0
        %730 = vmatpush1.msra.mxu0 0.0
        %731 = vmatprep.subr.mxu0 0.0
        %732 = vmatpush1.msra.mxu0 0.0
        %733 = vmatprep.subr.mxu0 0.0
        %734 = vmatpush1.msra.mxu0 0.0
        %735 = vmatprep.subr.mxu0 0.0
        %736 = vmatpush1.msra.mxu0 0.0
        %737 = vmatprep.subr.mxu0 0.0
        %738 = vmatpush1.msra.mxu0 0.0
        %739 = vmatprep.subr.mxu0 0.0
        %740 = vmatpush1.msra.mxu0 0.0
        %741 = vmatprep.subr.mxu0 0.0
        %742 = vmatpush1.msra.mxu0 0.0
        %743 = vmatprep.subr.mxu0 0.0
        %744 = vmatpush1.msra.mxu0 0.0
        %745 = vmatprep.mubr.f32.mxu0 0.0
        %746 = vmatmul.mubr.f32.gmra.mrb[0].mxu0 %v282
        %v747 = vpop.f32.mrb[0].mxu0
        %v748 = vadd.f32 %v498, %v747
        %v749 = vpop.f32.mrb[0].mxu0
        %v750 = vadd.f32 %v502, %v749
        %751 = vdwg.mxu0
        %752 = vmatprep.subr.mxu0 %v290
        %753 = vmatpush1.msra.mxu0 %v289
        %754 = vmatprep.subr.mxu0 %v302
        %755 = vmatpush1.msra.mxu0 %v301
        %756 = vmatprep.subr.mxu0 %v314
        %757 = vmatpush1.msra.mxu0 %v313
        %758 = vmatprep.subr.mxu0 %v326
        %759 = vmatpush1.msra.mxu0 %v325
        %760 = vmatprep.subr.mxu0 %v338
        %761 = vmatpush1.msra.mxu0 %v337
        %762 = vmatprep.subr.mxu0 %v350
        %763 = vmatpush1.msra.mxu0 %v349
        %764 = vmatprep.subr.mxu0 %v362
        %765 = vmatpush1.msra.mxu0 %v361
        %766 = vmatprep.subr.mxu0 %v374
        %767 = vmatpush1.msra.mxu0 %v373
        %768 = vmatprep.subr.mxu0 %v386
        %769 = vmatpush1.msra.mxu0 %v385
        %770 = vmatprep.subr.mxu0 %v398
        %771 = vmatpush1.msra.mxu0 %v397
        %772 = vmatprep.subr.mxu0 %v410
        %773 = vmatpush1.msra.mxu0 %v409
        %774 = vmatprep.subr.mxu0 %v422
        %775 = vmatpush1.msra.mxu0 %v421
        %776 = vmatprep.subr.mxu0 %v434
        %777 = vmatpush1.msra.mxu0 %v433
        %778 = vmatprep.subr.mxu0 %v446
        %779 = vmatpush1.msra.mxu0 %v445
        %780 = vmatprep.subr.mxu0 %v458
        %781 = vmatpush1.msra.mxu0 %v457
        %782 = vmatprep.subr.mxu0 %v470
        %783 = vmatpush1.msra.mxu0 %v469
        %784 = vmatprep.subr.mxu0 0.0
        %785 = vmatpush1.msra.mxu0 0.0
        %786 = vmatprep.subr.mxu0 0.0
        %787 = vmatpush1.msra.mxu0 0.0
        %788 = vmatprep.subr.mxu0 0.0
        %789 = vmatpush1.msra.mxu0 0.0
        %790 = vmatprep.subr.mxu0 0.0
        %791 = vmatpush1.msra.mxu0 0.0
        %792 = vmatprep.subr.mxu0 0.0
        %793 = vmatpush1.msra.mxu0 0.0
        %794 = vmatprep.subr.mxu0 0.0
        %795 = vmatpush1.msra.mxu0 0.0
        %796 = vmatprep.subr.mxu0 0.0
        %797 = vmatpush1.msra.mxu0 0.0
        %798 = vmatprep.subr.mxu0 0.0
        %799 = vmatpush1.msra.mxu0 0.0
        %800 = vmatprep.subr.mxu0 0.0
        %801 = vmatpush1.msra.mxu0 0.0
        %802 = vmatprep.subr.mxu0 0.0
        %803 = vmatpush1.msra.mxu0 0.0
        %804 = vmatprep.subr.mxu0 0.0
        %805 = vmatpush1.msra.mxu0 0.0
        %806 = vmatprep.subr.mxu0 0.0
        %807 = vmatpush1.msra.mxu0 0.0
        %808 = vmatprep.subr.mxu0 0.0
        %809 = vmatpush1.msra.mxu0 0.0
        %810 = vmatprep.subr.mxu0 0.0
        %811 = vmatpush1.msra.mxu0 0.0
        %812 = vmatprep.subr.mxu0 0.0
        %813 = vmatpush1.msra.mxu0 0.0
        %814 = vmatprep.subr.mxu0 0.0
        %815 = vmatpush1.msra.mxu0 0.0
        %816 = vmatprep.mubr.f32.mxu0 0.0
        %817 = vmatmul.mubr.f32.gmra.mrb[0].mxu0 %v282
        %v818 = vpop.f32.mrb[0].mxu0
        %v819 = vadd.f32 %v506, %v818
        %v820 = vpop.f32.mrb[0].mxu0
        %v821 = vadd.f32 %v510, %v820
        %822 = vdwg.mxu0
        %823 = vmatprep.subr.mxu0 %v292
        %824 = vmatpush1.msra.mxu0 %v291
        %825 = vmatprep.subr.mxu0 %v304
        %826 = vmatpush1.msra.mxu0 %v303
        %827 = vmatprep.subr.mxu0 %v316
        %828 = vmatpush1.msra.mxu0 %v315
        %829 = vmatprep.subr.mxu0 %v328
        %830 = vmatpush1.msra.mxu0 %v327
        %831 = vmatprep.subr.mxu0 %v340
        %832 = vmatpush1.msra.mxu0 %v339
        %833 = vmatprep.subr.mxu0 %v352
        %834 = vmatpush1.msra.mxu0 %v351
        %835 = vmatprep.subr.mxu0 %v364
        %836 = vmatpush1.msra.mxu0 %v363
        %837 = vmatprep.subr.mxu0 %v376
        %838 = vmatpush1.msra.mxu0 %v375
        %839 = vmatprep.subr.mxu0 %v388
        %840 = vmatpush1.msra.mxu0 %v387
        %841 = vmatprep.subr.mxu0 %v400
        %842 = vmatpush1.msra.mxu0 %v399
        %843 = vmatprep.subr.mxu0 %v412
        %844 = vmatpush1.msra.mxu0 %v411
        %845 = vmatprep.subr.mxu0 %v424
        %846 = vmatpush1.msra.mxu0 %v423
        %847 = vmatprep.subr.mxu0 %v436
        %848 = vmatpush1.msra.mxu0 %v435
        %849 = vmatprep.subr.mxu0 %v448
        %850 = vmatpush1.msra.mxu0 %v447
        %851 = vmatprep.subr.mxu0 %v460
        %852 = vmatpush1.msra.mxu0 %v459
        %853 = vmatprep.subr.mxu0 %v472
        %854 = vmatpush1.msra.mxu0 %v471
        %855 = vmatprep.subr.mxu0 0.0
        %856 = vmatpush1.msra.mxu0 0.0
        %857 = vmatprep.subr.mxu0 0.0
        %858 = vmatpush1.msra.mxu0 0.0
        %859 = vmatprep.subr.mxu0 0.0
        %860 = vmatpush1.msra.mxu0 0.0
        %861 = vmatprep.subr.mxu0 0.0
        %862 = vmatpush1.msra.mxu0 0.0
        %863 = vmatprep.subr.mxu0 0.0
        %864 = vmatpush1.msra.mxu0 0.0
        %865 = vmatprep.subr.mxu0 0.0
        %866 = vmatpush1.msra.mxu0 0.0
        %867 = vmatprep.subr.mxu0 0.0
        %868 = vmatpush1.msra.mxu0 0.0
        %869 = vmatprep.subr.mxu0 0.0
        %870 = vmatpush1.msra.mxu0 0.0
        %871 = vmatprep.subr.mxu0 0.0
        %872 = vmatpush1.msra.mxu0 0.0
        %873 = vmatprep.subr.mxu0 0.0
        %874 = vmatpush1.msra.mxu0 0.0
        %875 = vmatprep.subr.mxu0 0.0
        %876 = vmatpush1.msra.mxu0 0.0
        %877 = vmatprep.subr.mxu0 0.0
        %878 = vmatpush1.msra.mxu0 0.0
        %879 = vmatprep.subr.mxu0 0.0
        %880 = vmatpush1.msra.mxu0 0.0
        %881 = vmatprep.subr.mxu0 0.0
        %882 = vmatpush1.msra.mxu0 0.0
        %883 = vmatprep.subr.mxu0 0.0
        %884 = vmatpush1.msra.mxu0 0.0
        %885 = vmatprep.subr.mxu0 0.0
        %886 = vmatpush1.msra.mxu0 0.0
        %887 = vmatprep.mubr.f32.mxu0 0.0
        %888 = vmatmul.mubr.f32.gmra.mrb[0].mxu0 %v282
        %v889 = vpop.f32.mrb[0].mxu0
        %v890 = vadd.f32 %v514, %v889
        %v891 = vpop.f32.mrb[0].mxu0
        %v892 = vadd.f32 %v518, %v891
        %893 = vdwg.mxu0
        %894 = vmatprep.subr.mxu0 %v294
        %895 = vmatpush1.msra.mxu0 %v293
        %896 = vmatprep.subr.mxu0 %v306
        %897 = vmatpush1.msra.mxu0 %v305
        %898 = vmatprep.subr.mxu0 %v318
        %899 = vmatpush1.msra.mxu0 %v317
        %900 = vmatprep.subr.mxu0 %v330
        %901 = vmatpush1.msra.mxu0 %v329
        %902 = vmatprep.subr.mxu0 %v342
        %903 = vmatpush1.msra.mxu0 %v341
        %904 = vmatprep.subr.mxu0 %v354
        %905 = vmatpush1.msra.mxu0 %v353
        %906 = vmatprep.subr.mxu0 %v366
        %907 = vmatpush1.msra.mxu0 %v365
        %908 = vmatprep.subr.mxu0 %v378
        %909 = vmatpush1.msra.mxu0 %v377
        %910 = vmatprep.subr.mxu0 %v390
        %911 = vmatpush1.msra.mxu0 %v389
        %912 = vmatprep.subr.mxu0 %v402
        %913 = vmatpush1.msra.mxu0 %v401
        %914 = vmatprep.subr.mxu0 %v414
        %915 = vmatpush1.msra.mxu0 %v413
        %916 = vmatprep.subr.mxu0 %v426
        %917 = vmatpush1.msra.mxu0 %v425
        %918 = vmatprep.subr.mxu0 %v438
        %919 = vmatpush1.msra.mxu0 %v437
        %920 = vmatprep.subr.mxu0 %v450
        %921 = vmatpush1.msra.mxu0 %v449
        %922 = vmatprep.subr.mxu0 %v462
        %923 = vmatpush1.msra.mxu0 %v461
        %924 = vmatprep.subr.mxu0 %v474
        %925 = vmatpush1.msra.mxu0 %v473
        %926 = vmatprep.subr.mxu0 0.0
        %927 = vmatpush1.msra.mxu0 0.0
        %928 = vmatprep.subr.mxu0 0.0
        %929 = vmatpush1.msra.mxu0 0.0
        %930 = vmatprep.subr.mxu0 0.0
        %931 = vmatpush1.msra.mxu0 0.0
        %932 = vmatprep.subr.mxu0 0.0
        %933 = vmatpush1.msra.mxu0 0.0
        %934 = vmatprep.subr.mxu0 0.0
        %935 = vmatpush1.msra.mxu0 0.0
        %936 = vmatprep.subr.mxu0 0.0
        %937 = vmatpush1.msra.mxu0 0.0
        %938 = vmatprep.subr.mxu0 0.0
        %939 = vmatpush1.msra.mxu0 0.0
        %940 = vmatprep.subr.mxu0 0.0
        %941 = vmatpush1.msra.mxu0 0.0
        %942 = vmatprep.subr.mxu0 0.0
        %943 = vmatpush1.msra.mxu0 0.0
        %944 = vmatprep.subr.mxu0 0.0
        %945 = vmatpush1.msra.mxu0 0.0
        %946 = vmatprep.subr.mxu0 0.0
        %947 = vmatpush1.msra.mxu0 0.0
        %948 = vmatprep.subr.mxu0 0.0
        %949 = vmatpush1.msra.mxu0 0.0
        %950 = vmatprep.subr.mxu0 0.0
        %951 = vmatpush1.msra.mxu0 0.0
        %952 = vmatprep.subr.mxu0 0.0
        %953 = vmatpush1.msra.mxu0 0.0
        %954 = vmatprep.subr.mxu0 0.0
        %955 = vmatpush1.msra.mxu0 0.0
        %956 = vmatprep.subr.mxu0 0.0
        %957 = vmatpush1.msra.mxu0 0.0
        %958 = vmatprep.mubr.f32.mxu0 0.0
        %959 = vmatmul.mubr.f32.gmra.mrb[0].mxu0 %v282
        %v960 = vpop.f32.mrb[0].mxu0
        %v961 = vadd.f32 %v522, %v960
        %v962 = vpop.f32.mrb[0].mxu0
        %v963 = vadd.f32 %v526, %v962
        %964 = vdwg.mxu0
        %965 = vmatprep.subr.mxu0 0.0
        %966 = vmatpush1.xpose.msra.mxu0 %v748
        %967 = vmatprep.subr.mxu0 0.0
        %968 = vmatpush1.xpose.msra.mxu0 0.0
        %969 = vmatprep.subr.mxu0 0.0
        %970 = vmatpush1.xpose.msra.mxu0 0.0
        %971 = vmatprep.subr.mxu0 0.0
        %972 = vmatpush1.xpose.msra.mxu0 0.0
        %973 = vmatprep.subr.mxu0 0.0
        %974 = vmatpush1.xpose.msra.mxu0 0.0
        %975 = vmatprep.subr.mxu0 0.0
        %976 = vmatpush1.xpose.msra.mxu0 0.0
        %977 = vmatprep.subr.mxu0 0.0
        %978 = vmatpush1.xpose.msra.mxu0 0.0
        %979 = vmatprep.subr.mxu0 0.0
        %980 = vmatpush1.xpose.msra.mxu0 0.0
        %981 = vmatprep.subr.mxu0 0.0
        %982 = vmatpush1.xpose.msra.mxu0 0.0
        %983 = vmatprep.subr.mxu0 0.0
        %984 = vmatpush1.xpose.msra.mxu0 0.0
        %985 = vmatprep.subr.mxu0 0.0
        %986 = vmatpush1.xpose.msra.mxu0 0.0
        %987 = vmatprep.subr.mxu0 0.0
        %988 = vmatpush1.xpose.msra.mxu0 0.0
        %989 = vmatprep.subr.mxu0 0.0
        %990 = vmatpush1.xpose.msra.mxu0 0.0
        %991 = vmatprep.subr.mxu0 0.0
        %992 = vmatpush1.xpose.msra.mxu0 0.0
        %993 = vmatprep.subr.mxu0 0.0
        %994 = vmatpush1.xpose.msra.mxu0 0.0
        %995 = vmatprep.subr.mxu0 0.0
        %996 = vmatpush1.xpose.msra.mxu0 0.0
        %997 = vmatprep.subr.mxu0 0.0
        %998 = vmatpush1.xpose.msra.mxu0 0.0
        %999 = vmatprep.subr.mxu0 0.0
        %1000 = vmatpush1.xpose.msra.mxu0 0.0
        %1001 = vmatprep.subr.mxu0 0.0
        %1002 = vmatpush1.xpose.msra.mxu0 0.0
        %1003 = vmatprep.subr.mxu0 0.0
        %1004 = vmatpush1.xpose.msra.mxu0 0.0
        %1005 = vmatprep.subr.mxu0 0.0
        %1006 = vmatpush1.xpose.msra.mxu0 0.0
        %1007 = vmatprep.subr.mxu0 0.0
        %1008 = vmatpush1.xpose.msra.mxu0 0.0
        %1009 = vmatprep.subr.mxu0 0.0
        %1010 = vmatpush1.xpose.msra.mxu0 0.0
        %1011 = vmatprep.subr.mxu0 0.0
        %1012 = vmatpush1.xpose.msra.mxu0 0.0
        %1013 = vmatprep.subr.mxu0 0.0
        %1014 = vmatpush1.xpose.msra.mxu0 0.0
        %1015 = vmatprep.subr.mxu0 0.0
        %1016 = vmatpush1.xpose.msra.mxu0 0.0
        %1017 = vmatprep.subr.mxu0 0.0
        %1018 = vmatpush1.xpose.msra.mxu0 0.0
        %1019 = vmatprep.subr.mxu0 0.0
        %1020 = vmatpush1.xpose.msra.mxu0 0.0
        %1021 = vmatprep.subr.mxu0 0.0
        %1022 = vmatpush1.xpose.msra.mxu0 0.0
        %1023 = vmatprep.subr.mxu0 0.0
        %1024 = vmatpush1.xpose.msra.mxu0 0.0
        %1025 = vmatprep.subr.mxu0 0.0
        %1026 = vmatpush1.xpose.msra.mxu0 0.0
        %1027 = vmatprep.subr.mxu0 0.0
        %1028 = vmatpush1.xpose.msra.mxu0 0.0
        %1029 = vmatprep.mubr.f32.mxu0 0.0
        %1030 = vmatmul.mubr.f32.gmra.mrb[0].mxu0 %v606
        %v1031 = vpop.f32.mrb[0].mxu0
        %v1032 = vadd.f32 0.0, %v1031
        %v1033 = vpop.f32.mrb[0].mxu0
        %1034 = vdwg.mxu0
        %vm1035 = vcmask 64512
        %v1036 = vsel %vm1035, %v1032, -inf
        %1037 = vmax.xlane.f32.xlu0 %v1036
        %v1038 = vpop.xlane.xlu0 %1037
        %v1039 = vsub.f32 %v1032, %v1038
        %v1040 = vmul.f32 %v1039, 1.442695
        %v1041 = vpow.pop %v1040
        %v1042 = vsel %vm1035, %v1041, 0.0
        %1043 = vadd.xlane.f32.xlu0 %v1042
        %v1044 = vpop.xlane.xlu0 %1043
        %v1045 = vrcp.pop %v1044
        %v1046 = vmul.f32 %v1041, %v1045
        %v1048 = vsel %vm1035, %v1046, 0
        %1050 = vmatprep.subr.mxu0 0.0
        %1051 = vmatpush1.msra.mxu0 %v890
        %1052 = vmatprep.subr.mxu0 0.0
        %1053 = vmatpush1.msra.mxu0 0.0
        %1054 = vmatprep.subr.mxu0 0.0
        %1055 = vmatpush1.msra.mxu0 0.0
        %1056 = vmatprep.subr.mxu0 0.0
        %1057 = vmatpush1.msra.mxu0 0.0
        %1058 = vmatprep.subr.mxu0 0.0
        %1059 = vmatpush1.msra.mxu0 0.0
        %1060 = vmatprep.subr.mxu0 0.0
        %1061 = vmatpush1.msra.mxu0 0.0
        %1062 = vmatprep.subr.mxu0 0.0
        %1063 = vmatpush1.msra.mxu0 0.0
        %1064 = vmatprep.subr.mxu0 0.0
        %1065 = vmatpush1.msra.mxu0 0.0
        %1066 = vmatprep.subr.mxu0 0.0
        %1067 = vmatpush1.msra.mxu0 0.0
        %1068 = vmatprep.subr.mxu0 0.0
        %1069 = vmatpush1.msra.mxu0 0.0
        %1070 = vmatprep.subr.mxu0 0.0
        %1071 = vmatpush1.msra.mxu0 0.0
        %1072 = vmatprep.subr.mxu0 0.0
        %1073 = vmatpush1.msra.mxu0 0.0
        %1074 = vmatprep.subr.mxu0 0.0
        %1075 = vmatpush1.msra.mxu0 0.0
        %1076 = vmatprep.subr.mxu0 0.0
        %1077 = vmatpush1.msra.mxu0 0.0
        %1078 = vmatprep.subr.mxu0 0.0
        %1079 = vmatpush1.msra.mxu0 0.0
        %1080 = vmatprep.subr.mxu0 0.0
        %1081 = vmatpush1.msra.mxu0 0.0
        %1082 = vmatprep.subr.mxu0 0.0
        %1083 = vmatpush1.msra.mxu0 0.0
        %1084 = vmatprep.subr.mxu0 0.0
        %1085 = vmatpush1.msra.mxu0 0.0
        %1086 = vmatprep.subr.mxu0 0.0
        %1087 = vmatpush1.msra.mxu0 0.0
        %1088 = vmatprep.subr.mxu0 0.0
        %1089 = vmatpush1.msra.mxu0 0.0
        %1090 = vmatprep.subr.mxu0 0.0
        %1091 = vmatpush1.msra.mxu0 0.0
        %1092 = vmatprep.subr.mxu0 0.0
        %1093 = vmatpush1.msra.mxu0 0.0
        %1094 = vmatprep.subr.mxu0 0.0
        %1095 = vmatpush1.msra.mxu0 0.0
        %1096 = vmatprep.subr.mxu0 0.0
        %1097 = vmatpush1.msra.mxu0 0.0
        %1098 = vmatprep.subr.mxu0 0.0
        %1099 = vmatpush1.msra.mxu0 0.0
        %1100 = vmatprep.subr.mxu0 0.0
        %1101 = vmatpush1.msra.mxu0 0.0
        %1102 = vmatprep.subr.mxu0 0.0
        %1103 = vmatpush1.msra.mxu0 0.0
        %1104 = vmatprep.subr.mxu0 0.0
        %1105 = vmatpush1.msra.mxu0 0.0
        %1106 = vmatprep.subr.mxu0 0.0
        %1107 = vmatpush1.msra.mxu0 0.0
        %1108 = vmatprep.subr.mxu0 0.0
        %1109 = vmatpush1.msra.mxu0 0.0
        %1110 = vmatprep.subr.mxu0 0.0
        %1111 = vmatpush1.msra.mxu0 0.0
        %1112 = vmatprep.subr.mxu0 0.0
        %1113 = vmatpush1.msra.mxu0 0.0
        %1114 = vmatprep.mubr.f32.mxu0 0.0
        %1115 = vmatmul.mubr.f32.gmra.mrb[0].mxu0 %v1048
        %v1116 = vpop.f32.mrb[0].mxu0
        %v1117 = vadd.f32 0.0, %v1116
        %v1118 = vpop.f32.mrb[0].mxu0
        %1119 = vdwg.mxu0
        %v1120 = vld [vmem:[#allocation8] sm:$0xff]
        %v1121 = vld [vmem:[#allocation8 + $0x8] sm:$0xff]
        %v1122 = vld [vmem:[#allocation8 + $0x10] sm:$0xff]
        %v1123 = vld [vmem:[#allocation8 + $0x18] sm:$0xff]
        %v1124 = vld [vmem:[#allocation8 + $0x20] sm:$0xff]
        %v1125 = vld [vmem:[#allocation8 + $0x28] sm:$0xff]
        %v1126 = vld [vmem:[#allocation8 + $0x30] sm:$0xff]
        %v1127 = vld [vmem:[#allocation8 + $0x38] sm:$0xff]
        %v1128 = vld [vmem:[#allocation8 + $0x40] sm:$0xff]
        %v1129 = vld [vmem:[#allocation8 + $0x48] sm:$0xff]
        %v1130 = vld [vmem:[#allocation8 + $0x50] sm:$0xff]
        %v1131 = vld [vmem:[#allocation8 + $0x58] sm:$0xff]
        %v1132 = vld [vmem:[#allocation8 + $0x60] sm:$0xff]
        %v1133 = vld [vmem:[#allocation8 + $0x68] sm:$0xff]
        %v1134 = vld [vmem:[#allocation8 + $0x70] sm:$0xff]
        %v1135 = vld [vmem:[#allocation8 + $0x78] sm:$0xff]
        %1136 = vmatprep.subr.mxu0 0.0
        %1137 = vmatpush1.xpose.msra.mxu0 %v750
        %1138 = vmatprep.subr.mxu0 0.0
        %1139 = vmatpush1.xpose.msra.mxu0 0.0
        %1140 = vmatprep.subr.mxu0 0.0
        %1141 = vmatpush1.xpose.msra.mxu0 0.0
        %1142 = vmatprep.subr.mxu0 0.0
        %1143 = vmatpush1.xpose.msra.mxu0 0.0
        %1144 = vmatprep.subr.mxu0 0.0
        %1145 = vmatpush1.xpose.msra.mxu0 0.0
        %1146 = vmatprep.subr.mxu0 0.0
        %1147 = vmatpush1.xpose.msra.mxu0 0.0
        %1148 = vmatprep.subr.mxu0 0.0
        %1149 = vmatpush1.xpose.msra.mxu0 0.0
        %1150 = vmatprep.subr.mxu0 0.0
        %1151 = vmatpush1.xpose.msra.mxu0 0.0
        %1152 = vmatprep.subr.mxu0 0.0
        %1153 = vmatpush1.xpose.msra.mxu0 0.0
        %1154 = vmatprep.subr.mxu0 0.0
        %1155 = vmatpush1.xpose.msra.mxu0 0.0
        %1156 = vmatprep.subr.mxu0 0.0
        %1157 = vmatpush1.xpose.msra.mxu0 0.0
        %1158 = vmatprep.subr.mxu0 0.0
        %1159 = vmatpush1.xpose.msra.mxu0 0.0
        %1160 = vmatprep.subr.mxu0 0.0
        %1161 = vmatpush1.xpose.msra.mxu0 0.0
        %1162 = vmatprep.subr.mxu0 0.0
        %1163 = vmatpush1.xpose.msra.mxu0 0.0
        %1164 = vmatprep.subr.mxu0 0.0
        %1165 = vmatpush1.xpose.msra.mxu0 0.0
        %1166 = vmatprep.subr.mxu0 0.0
        %1167 = vmatpush1.xpose.msra.mxu0 0.0
        %1168 = vmatprep.subr.mxu0 0.0
        %1169 = vmatpush1.xpose.msra.mxu0 0.0
        %1170 = vmatprep.subr.mxu0 0.0
        %1171 = vmatpush1.xpose.msra.mxu0 0.0
        %1172 = vmatprep.subr.mxu0 0.0
        %1173 = vmatpush1.xpose.msra.mxu0 0.0
        %1174 = vmatprep.subr.mxu0 0.0
        %1175 = vmatpush1.xpose.msra.mxu0 0.0
        %1176 = vmatprep.subr.mxu0 0.0
        %1177 = vmatpush1.xpose.msra.mxu0 0.0
        %1178 = vmatprep.subr.mxu0 0.0
        %1179 = vmatpush1.xpose.msra.mxu0 0.0
        %1180 = vmatprep.subr.mxu0 0.0
        %1181 = vmatpush1.xpose.msra.mxu0 0.0
        %1182 = vmatprep.subr.mxu0 0.0
        %1183 = vmatpush1.xpose.msra.mxu0 0.0
        %1184 = vmatprep.subr.mxu0 0.0
        %1185 = vmatpush1.xpose.msra.mxu0 0.0
        %1186 = vmatprep.subr.mxu0 0.0
        %1187 = vmatpush1.xpose.msra.mxu0 0.0
        %1188 = vmatprep.subr.mxu0 0.0
        %1189 = vmatpush1.xpose.msra.mxu0 0.0
        %1190 = vmatprep.subr.mxu0 0.0
        %1191 = vmatpush1.xpose.msra.mxu0 0.0
        %1192 = vmatprep.subr.mxu0 0.0
        %1193 = vmatpush1.xpose.msra.mxu0 0.0
        %1194 = vmatprep.subr.mxu0 0.0
        %1195 = vmatpush1.xpose.msra.mxu0 0.0
        %1196 = vmatprep.subr.mxu0 0.0
        %1197 = vmatpush1.xpose.msra.mxu0 0.0
        %1198 = vmatprep.subr.mxu0 0.0
        %1199 = vmatpush1.xpose.msra.mxu0 0.0
        %1200 = vmatprep.mubr.f32.mxu0 0.0
        %1201 = vmatmul.mubr.f32.gmra.mrb[0].mxu0 %v608
        %v1202 = vpop.f32.mrb[0].mxu0
        %v1203 = vadd.f32 0.0, %v1202
        %v1204 = vpop.f32.mrb[0].mxu0
        %1205 = vdwg.mxu0
        %v1206 = vsel %vm1035, %v1203, -inf
        %1207 = vmax.xlane.f32.xlu0 %v1206
        %v1208 = vpop.xlane.xlu0 %1207
        %v1209 = vsub.f32 %v1203, %v1208
        %v1210 = vmul.f32 %v1209, 1.442695
        %v1211 = vpow.pop %v1210
        %v1212 = vsel %vm1035, %v1211, 0.0
        %1213 = vadd.xlane.f32.xlu0 %v1212
        %v1214 = vpop.xlane.xlu0 %1213
        %v1215 = vrcp.pop %v1214
        %v1216 = vmul.f32 %v1211, %v1215
        %v1218 = vsel %vm1035, %v1216, 0
        %1220 = vmatprep.subr.mxu0 0.0
        %1221 = vmatpush1.msra.mxu0 %v892
        %1222 = vmatprep.subr.mxu0 0.0
        %1223 = vmatpush1.msra.mxu0 0.0
        %1224 = vmatprep.subr.mxu0 0.0
        %1225 = vmatpush1.msra.mxu0 0.0
        %1226 = vmatprep.subr.mxu0 0.0
        %1227 = vmatpush1.msra.mxu0 0.0
        %1228 = vmatprep.subr.mxu0 0.0
        %1229 = vmatpush1.msra.mxu0 0.0
        %1230 = vmatprep.subr.mxu0 0.0
        %1231 = vmatpush1.msra.mxu0 0.0
        %1232 = vmatprep.subr.mxu0 0.0
        %1233 = vmatpush1.msra.mxu0 0.0
        %1234 = vmatprep.subr.mxu0 0.0
        %1235 = vmatpush1.msra.mxu0 0.0
        %1236 = vmatprep.subr.mxu0 0.0
        %1237 = vmatpush1.msra.mxu0 0.0
        %1238 = vmatprep.subr.mxu0 0.0
        %1239 = vmatpush1.msra.mxu0 0.0
        %1240 = vmatprep.subr.mxu0 0.0
        %1241 = vmatpush1.msra.mxu0 0.0
        %1242 = vmatprep.subr.mxu0 0.0
        %1243 = vmatpush1.msra.mxu0 0.0
        %1244 = vmatprep.subr.mxu0 0.0
        %1245 = vmatpush1.msra.mxu0 0.0
        %1246 = vmatprep.subr.mxu0 0.0
        %1247 = vmatpush1.msra.mxu0 0.0
        %1248 = vmatprep.subr.mxu0 0.0
        %1249 = vmatpush1.msra.mxu0 0.0
        %1250 = vmatprep.subr.mxu0 0.0
        %1251 = vmatpush1.msra.mxu0 0.0
        %1252 = vmatprep.subr.mxu0 0.0
        %1253 = vmatpush1.msra.mxu0 0.0
        %1254 = vmatprep.subr.mxu0 0.0
        %1255 = vmatpush1.msra.mxu0 0.0
        %1256 = vmatprep.subr.mxu0 0.0
        %1257 = vmatpush1.msra.mxu0 0.0
        %1258 = vmatprep.subr.mxu0 0.0
        %1259 = vmatpush1.msra.mxu0 0.0
        %1260 = vmatprep.subr.mxu0 0.0
        %1261 = vmatpush1.msra.mxu0 0.0
        %1262 = vmatprep.subr.mxu0 0.0
        %1263 = vmatpush1.msra.mxu0 0.0
        %1264 = vmatprep.subr.mxu0 0.0
        %1265 = vmatpush1.msra.mxu0 0.0
        %1266 = vmatprep.subr.mxu0 0.0
        %1267 = vmatpush1.msra.mxu0 0.0
        %1268 = vmatprep.subr.mxu0 0.0
        %1269 = vmatpush1.msra.mxu0 0.0
        %1270 = vmatprep.subr.mxu0 0.0
        %1271 = vmatpush1.msra.mxu0 0.0
        %1272 = vmatprep.subr.mxu0 0.0
        %1273 = vmatpush1.msra.mxu0 0.0
        %1274 = vmatprep.subr.mxu0 0.0
        %1275 = vmatpush1.msra.mxu0 0.0
        %1276 = vmatprep.subr.mxu0 0.0
        %1277 = vmatpush1.msra.mxu0 0.0
        %1278 = vmatprep.subr.mxu0 0.0
        %1279 = vmatpush1.msra.mxu0 0.0
        %1280 = vmatprep.subr.mxu0 0.0
        %1281 = vmatpush1.msra.mxu0 0.0
        %1282 = vmatprep.subr.mxu0 0.0
        %1283 = vmatpush1.msra.mxu0 0.0
        %1284 = vmatprep.mubr.f32.mxu0 0.0
        %1285 = vmatmul.mubr.f32.gmra.mrb[0].mxu0 %v1218
        %v1286 = vpop.f32.mrb[0].mxu0
        %v1287 = vadd.f32 0.0, %v1286
        %v1288 = vpop.f32.mrb[0].mxu0
        %1289 = vdwg.mxu0
        %v1290 = vld [vmem:[#allocation8 + $0x80] sm:$0xff]
        %v1291 = vld [vmem:[#allocation8 + $0x88] sm:$0xff]
        %v1292 = vld [vmem:[#allocation8 + $0x90] sm:$0xff]
        %v1293 = vld [vmem:[#allocation8 + $0x98] sm:$0xff]
        %v1294 = vld [vmem:[#allocation8 + $0xa0] sm:$0xff]
        %v1295 = vld [vmem:[#allocation8 + $0xa8] sm:$0xff]
        %v1296 = vld [vmem:[#allocation8 + $0xb0] sm:$0xff]
        %v1297 = vld [vmem:[#allocation8 + $0xb8] sm:$0xff]
        %v1298 = vld [vmem:[#allocation8 + $0xc0] sm:$0xff]
        %v1299 = vld [vmem:[#allocation8 + $0xc8] sm:$0xff]
        %v1300 = vld [vmem:[#allocation8 + $0xd0] sm:$0xff]
        %v1301 = vld [vmem:[#allocation8 + $0xd8] sm:$0xff]
        %v1302 = vld [vmem:[#allocation8 + $0xe0] sm:$0xff]
        %v1303 = vld [vmem:[#allocation8 + $0xe8] sm:$0xff]
        %v1304 = vld [vmem:[#allocation8 + $0xf0] sm:$0xff]
        %v1305 = vld [vmem:[#allocation8 + $0xf8] sm:$0xff]
        %1306 = vmatprep.subr.mxu0 0.0
        %1307 = vmatpush1.msra.mxu0 %v1290
        %1308 = vmatprep.subr.mxu0 0.0
        %1309 = vmatpush1.msra.mxu0 %v1291
        %1310 = vmatprep.subr.mxu0 0.0
        %1311 = vmatpush1.msra.mxu0 %v1292
        %1312 = vmatprep.subr.mxu0 0.0
        %1313 = vmatpush1.msra.mxu0 %v1293
        %1314 = vmatprep.subr.mxu0 0.0
        %1315 = vmatpush1.msra.mxu0 %v1294
        %1316 = vmatprep.subr.mxu0 0.0
        %1317 = vmatpush1.msra.mxu0 %v1295
        %1318 = vmatprep.subr.mxu0 0.0
        %1319 = vmatpush1.msra.mxu0 %v1296
        %1320 = vmatprep.subr.mxu0 0.0
        %1321 = vmatpush1.msra.mxu0 %v1297
        %1322 = vmatprep.subr.mxu0 0.0
        %1323 = vmatpush1.msra.mxu0 %v1298
        %1324 = vmatprep.subr.mxu0 0.0
        %1325 = vmatpush1.msra.mxu0 %v1299
        %1326 = vmatprep.subr.mxu0 0.0
        %1327 = vmatpush1.msra.mxu0 %v1300
        %1328 = vmatprep.subr.mxu0 0.0
        %1329 = vmatpush1.msra.mxu0 %v1301
        %1330 = vmatprep.subr.mxu0 0.0
        %1331 = vmatpush1.msra.mxu0 %v1302
        %1332 = vmatprep.subr.mxu0 0.0
        %1333 = vmatpush1.msra.mxu0 %v1303
        %1334 = vmatprep.subr.mxu0 0.0
        %1335 = vmatpush1.msra.mxu0 %v1304
        %1336 = vmatprep.subr.mxu0 0.0
        %1337 = vmatpush1.msra.mxu0 %v1305
        %1338 = vmatprep.subr.mxu0 0.0
        %1339 = vmatpush1.msra.mxu0 0.0
        %1340 = vmatprep.subr.mxu0 0.0
        %1341 = vmatpush1.msra.mxu0 0.0
        %1342 = vmatprep.subr.mxu0 0.0
        %1343 = vmatpush1.msra.mxu0 0.0
        %1344 = vmatprep.subr.mxu0 0.0
        %1345 = vmatpush1.msra.mxu0 0.0
        %1346 = vmatprep.subr.mxu0 0.0
        %1347 = vmatpush1.msra.mxu0 0.0
        %1348 = vmatprep.subr.mxu0 0.0
        %1349 = vmatpush1.msra.mxu0 0.0
        %1350 = vmatprep.subr.mxu0 0.0
        %1351 = vmatpush1.msra.mxu0 0.0
        %1352 = vmatprep.subr.mxu0 0.0
        %1353 = vmatpush1.msra.mxu0 0.0
        %1354 = vmatprep.subr.mxu0 0.0
        %1355 = vmatpush1.msra.mxu0 0.0
        %1356 = vmatprep.subr.mxu0 0.0
        %1357 = vmatpush1.msra.mxu0 0.0
        %1358 = vmatprep.subr.mxu0 0.0
        %1359 = vmatpush1.msra.mxu0 0.0
        %1360 = vmatprep.subr.mxu0 0.0
        %1361 = vmatpush1.msra.mxu0 0.0
        %1362 = vmatprep.subr.mxu0 0.0
        %1363 = vmatpush1.msra.mxu0 0.0
        %1364 = vmatprep.subr.mxu0 0.0
        %1365 = vmatpush1.msra.mxu0 0.0
        %1366 = vmatprep.subr.mxu0 0.0
        %1367 = vmatpush1.msra.mxu0 0.0
        %1368 = vmatprep.subr.mxu0 0.0
        %1369 = vmatpush1.msra.mxu0 0.0
        %1370 = vmatprep.mubr.f32.mxu0 0.0
        %1371 = vmatmul.mubr.f32.gmra.mrb[0].mxu0 %v1287
        %v1372 = vpop.f32.mrb[0].mxu0
        %v1373 = vadd.f32 0.0, %v1372
        %v1374 = vpop.f32.mrb[0].mxu0
        %1375 = vdwg.mxu0
        %1376 = vmatprep.subr.mxu0 0.0
        %1377 = vmatpush1.msra.mxu0 %v1120
        %1378 = vmatprep.subr.mxu0 0.0
        %1379 = vmatpush1.msra.mxu0 %v1121
        %1380 = vmatprep.subr.mxu0 0.0
        %1381 = vmatpush1.msra.mxu0 %v1122
        %1382 = vmatprep.subr.mxu0 0.0
        %1383 = vmatpush1.msra.mxu0 %v1123
        %1384 = vmatprep.subr.mxu0 0.0
        %1385 = vmatpush1.msra.mxu0 %v1124
        %1386 = vmatprep.subr.mxu0 0.0
        %1387 = vmatpush1.msra.mxu0 %v1125
        %1388 = vmatprep.subr.mxu0 0.0
        %1389 = vmatpush1.msra.mxu0 %v1126
        %1390 = vmatprep.subr.mxu0 0.0
        %1391 = vmatpush1.msra.mxu0 %v1127
        %1392 = vmatprep.subr.mxu0 0.0
        %1393 = vmatpush1.msra.mxu0 %v1128
        %1394 = vmatprep.subr.mxu0 0.0
        %1395 = vmatpush1.msra.mxu0 %v1129
        %1396 = vmatprep.subr.mxu0 0.0
        %1397 = vmatpush1.msra.mxu0 %v1130
        %1398 = vmatprep.subr.mxu0 0.0
        %1399 = vmatpush1.msra.mxu0 %v1131
        %1400 = vmatprep.subr.mxu0 0.0
        %1401 = vmatpush1.msra.mxu0 %v1132
        %1402 = vmatprep.subr.mxu0 0.0
        %1403 = vmatpush1.msra.mxu0 %v1133
        %1404 = vmatprep.subr.mxu0 0.0
        %1405 = vmatpush1.msra.mxu0 %v1134
        %1406 = vmatprep.subr.mxu0 0.0
        %1407 = vmatpush1.msra.mxu0 %v1135
        %1408 = vmatprep.subr.mxu0 0.0
        %1409 = vmatpush1.msra.mxu0 0.0
        %1410 = vmatprep.subr.mxu0 0.0
        %1411 = vmatpush1.msra.mxu0 0.0
        %1412 = vmatprep.subr.mxu0 0.0
        %1413 = vmatpush1.msra.mxu0 0.0
        %1414 = vmatprep.subr.mxu0 0.0
        %1415 = vmatpush1.msra.mxu0 0.0
        %1416 = vmatprep.subr.mxu0 0.0
        %1417 = vmatpush1.msra.mxu0 0.0
        %1418 = vmatprep.subr.mxu0 0.0
        %1419 = vmatpush1.msra.mxu0 0.0
        %1420 = vmatprep.subr.mxu0 0.0
        %1421 = vmatpush1.msra.mxu0 0.0
        %1422 = vmatprep.subr.mxu0 0.0
        %1423 = vmatpush1.msra.mxu0 0.0
        %1424 = vmatprep.subr.mxu0 0.0
        %1425 = vmatpush1.msra.mxu0 0.0
        %1426 = vmatprep.subr.mxu0 0.0
        %1427 = vmatpush1.msra.mxu0 0.0
        %1428 = vmatprep.subr.mxu0 0.0
        %1429 = vmatpush1.msra.mxu0 0.0
        %1430 = vmatprep.subr.mxu0 0.0
        %1431 = vmatpush1.msra.mxu0 0.0
        %1432 = vmatprep.subr.mxu0 0.0
        %1433 = vmatpush1.msra.mxu0 0.0
        %1434 = vmatprep.subr.mxu0 0.0
        %1435 = vmatpush1.msra.mxu0 0.0
        %1436 = vmatprep.subr.mxu0 0.0
        %1437 = vmatpush1.msra.mxu0 0.0
        %1438 = vmatprep.subr.mxu0 0.0
        %1439 = vmatpush1.msra.mxu0 0.0
        %1440 = vmatprep.mubr.f32.mxu0 0.0
        %1441 = vmatmul.mubr.f32.gmra.mrb[0].mxu0 %v1117
        %v1442 = vpop.f32.mrb[0].mxu0
        %v1443 = vadd.f32 %v1373, %v1442
        %v1444 = vpop.f32.mrb[0].mxu0
        %1445 = vdwg.mxu0
        %1446 = vmatprep.subr.mxu0 0.0
        %1447 = vmatpush1.xpose.msra.mxu0 %v819
        %1448 = vmatprep.subr.mxu0 0.0
        %1449 = vmatpush1.xpose.msra.mxu0 0.0
        %1450 = vmatprep.subr.mxu0 0.0
        %1451 = vmatpush1.xpose.msra.mxu0 0.0
        %1452 = vmatprep.subr.mxu0 0.0
        %1453 = vmatpush1.xpose.msra.mxu0 0.0
        %1454 = vmatprep.subr.mxu0 0.0
        %1455 = vmatpush1.xpose.msra.mxu0 0.0
        %1456 = vmatprep.subr.mxu0 0.0
        %1457 = vmatpush1.xpose.msra.mxu0 0.0
        %1458 = vmatprep.subr.mxu0 0.0
        %1459 = vmatpush1.xpose.msra.mxu0 0.0
        %1460 = vmatprep.subr.mxu0 0.0
        %1461 = vmatpush1.xpose.msra.mxu0 0.0
        %1462 = vmatprep.subr.mxu0 0.0
        %1463 = vmatpush1.xpose.msra.mxu0 0.0
        %1464 = vmatprep.subr.mxu0 0.0
        %1465 = vmatpush1.xpose.msra.mxu0 0.0
        %1466 = vmatprep.subr.mxu0 0.0
        %1467 = vmatpush1.xpose.msra.mxu0 0.0
        %1468 = vmatprep.subr.mxu0 0.0
        %1469 = vmatpush1.xpose.msra.mxu0 0.0
        %1470 = vmatprep.subr.mxu0 0.0
        %1471 = vmatpush1.xpose.msra.mxu0 0.0
        %1472 = vmatprep.subr.mxu0 0.0
        %1473 = vmatpush1.xpose.msra.mxu0 0.0
        %1474 = vmatprep.subr.mxu0 0.0
        %1475 = vmatpush1.xpose.msra.mxu0 0.0
        %1476 = vmatprep.subr.mxu0 0.0
        %1477 = vmatpush1.xpose.msra.mxu0 0.0
        %1478 = vmatprep.subr.mxu0 0.0
        %1479 = vmatpush1.xpose.msra.mxu0 0.0
        %1480 = vmatprep.subr.mxu0 0.0
        %1481 = vmatpush1.xpose.msra.mxu0 0.0
        %1482 = vmatprep.subr.mxu0 0.0
        %1483 = vmatpush1.xpose.msra.mxu0 0.0
        %1484 = vmatprep.subr.mxu0 0.0
        %1485 = vmatpush1.xpose.msra.mxu0 0.0
        %1486 = vmatprep.subr.mxu0 0.0
        %1487 = vmatpush1.xpose.msra.mxu0 0.0
        %1488 = vmatprep.subr.mxu0 0.0
        %1489 = vmatpush1.xpose.msra.mxu0 0.0
        %1490 = vmatprep.subr.mxu0 0.0
        %1491 = vmatpush1.xpose.msra.mxu0 0.0
        %1492 = vmatprep.subr.mxu0 0.0
        %1493 = vmatpush1.xpose.msra.mxu0 0.0
        %1494 = vmatprep.subr.mxu0 0.0
        %1495 = vmatpush1.xpose.msra.mxu0 0.0
        %1496 = vmatprep.subr.mxu0 0.0
        %1497 = vmatpush1.xpose.msra.mxu0 0.0
        %1498 = vmatprep.subr.mxu0 0.0
        %1499 = vmatpush1.xpose.msra.mxu0 0.0
        %1500 = vmatprep.subr.mxu0 0.0
        %1501 = vmatpush1.xpose.msra.mxu0 0.0
        %1502 = vmatprep.subr.mxu0 0.0
        %1503 = vmatpush1.xpose.msra.mxu0 0.0
        %1504 = vmatprep.subr.mxu0 0.0
        %1505 = vmatpush1.xpose.msra.mxu0 0.0
        %1506 = vmatprep.subr.mxu0 0.0
        %1507 = vmatpush1.xpose.msra.mxu0 0.0
        %1508 = vmatprep.subr.mxu0 0.0
        %1509 = vmatpush1.xpose.msra.mxu0 0.0
        %1510 = vmatprep.mubr.f32.mxu0 0.0
        %1511 = vmatmul.mubr.f32.gmra.mrb[0].mxu0 %v677
        %v1512 = vpop.f32.mrb[0].mxu0
        %v1513 = vadd.f32 0.0, %v1512
        %v1514 = vpop.f32.mrb[0].mxu0
        %1515 = vdwg.mxu0
        %v1516 = vsel %vm1035, %v1513, -inf
        %1517 = vmax.xlane.f32.xlu0 %v1516
        %v1518 = vpop.xlane.xlu0 %1517
        %v1519 = vsub.f32 %v1513, %v1518
        %v1520 = vmul.f32 %v1519, 1.442695
        %v1521 = vpow.pop %v1520
        %v1522 = vsel %vm1035, %v1521, 0.0
        %1523 = vadd.xlane.f32.xlu0 %v1522
        %v1524 = vpop.xlane.xlu0 %1523
        %v1525 = vrcp.pop %v1524
        %v1526 = vmul.f32 %v1521, %v1525
        %v1528 = vsel %vm1035, %v1526, 0
        %1530 = vmatprep.subr.mxu0 0.0
        %1531 = vmatpush1.msra.mxu0 %v961
        %1532 = vmatprep.subr.mxu0 0.0
        %1533 = vmatpush1.msra.mxu0 0.0
        %1534 = vmatprep.subr.mxu0 0.0
        %1535 = vmatpush1.msra.mxu0 0.0
        %1536 = vmatprep.subr.mxu0 0.0
        %1537 = vmatpush1.msra.mxu0 0.0
        %1538 = vmatprep.subr.mxu0 0.0
        %1539 = vmatpush1.msra.mxu0 0.0
        %1540 = vmatprep.subr.mxu0 0.0
        %1541 = vmatpush1.msra.mxu0 0.0
        %1542 = vmatprep.subr.mxu0 0.0
        %1543 = vmatpush1.msra.mxu0 0.0
        %1544 = vmatprep.subr.mxu0 0.0
        %1545 = vmatpush1.msra.mxu0 0.0
        %1546 = vmatprep.subr.mxu0 0.0
        %1547 = vmatpush1.msra.mxu0 0.0
        %1548 = vmatprep.subr.mxu0 0.0
        %1549 = vmatpush1.msra.mxu0 0.0
        %1550 = vmatprep.subr.mxu0 0.0
        %1551 = vmatpush1.msra.mxu0 0.0
        %1552 = vmatprep.subr.mxu0 0.0
        %1553 = vmatpush1.msra.mxu0 0.0
        %1554 = vmatprep.subr.mxu0 0.0
        %1555 = vmatpush1.msra.mxu0 0.0
        %1556 = vmatprep.subr.mxu0 0.0
        %1557 = vmatpush1.msra.mxu0 0.0
        %1558 = vmatprep.subr.mxu0 0.0
        %1559 = vmatpush1.msra.mxu0 0.0
        %1560 = vmatprep.subr.mxu0 0.0
        %1561 = vmatpush1.msra.mxu0 0.0
        %1562 = vmatprep.subr.mxu0 0.0
        %1563 = vmatpush1.msra.mxu0 0.0
        %1564 = vmatprep.subr.mxu0 0.0
        %1565 = vmatpush1.msra.mxu0 0.0
        %1566 = vmatprep.subr.mxu0 0.0
        %1567 = vmatpush1.msra.mxu0 0.0
        %1568 = vmatprep.subr.mxu0 0.0
        %1569 = vmatpush1.msra.mxu0 0.0
        %1570 = vmatprep.subr.mxu0 0.0
        %1571 = vmatpush1.msra.mxu0 0.0
        %1572 = vmatprep.subr.mxu0 0.0
        %1573 = vmatpush1.msra.mxu0 0.0
        %1574 = vmatprep.subr.mxu0 0.0
        %1575 = vmatpush1.msra.mxu0 0.0
        %1576 = vmatprep.subr.mxu0 0.0
        %1577 = vmatpush1.msra.mxu0 0.0
        %1578 = vmatprep.subr.mxu0 0.0
        %1579 = vmatpush1.msra.mxu0 0.0
        %1580 = vmatprep.subr.mxu0 0.0
        %1581 = vmatpush1.msra.mxu0 0.0
        %1582 = vmatprep.subr.mxu0 0.0
        %1583 = vmatpush1.msra.mxu0 0.0
        %1584 = vmatprep.subr.mxu0 0.0
        %1585 = vmatpush1.msra.mxu0 0.0
        %1586 = vmatprep.subr.mxu0 0.0
        %1587 = vmatpush1.msra.mxu0 0.0
        %1588 = vmatprep.subr.mxu0 0.0
        %1589 = vmatpush1.msra.mxu0 0.0
        %1590 = vmatprep.subr.mxu0 0.0
        %1591 = vmatpush1.msra.mxu0 0.0
        %1592 = vmatprep.subr.mxu0 0.0
        %1593 = vmatpush1.msra.mxu0 0.0
        %1594 = vmatprep.mubr.f32.mxu0 0.0
        %1595 = vmatmul.mubr.f32.gmra.mrb[0].mxu0 %v1528
        %v1596 = vpop.f32.mrb[0].mxu0
        %v1597 = vadd.f32 0.0, %v1596
        %v1598 = vpop.f32.mrb[0].mxu0
        %1599 = vdwg.mxu0
        %v1600 = vld [vmem:[#allocation8 + $0x100] sm:$0xff]
        %v1601 = vld [vmem:[#allocation8 + $0x108] sm:$0xff]
        %v1602 = vld [vmem:[#allocation8 + $0x110] sm:$0xff]
        %v1603 = vld [vmem:[#allocation8 + $0x118] sm:$0xff]
        %v1604 = vld [vmem:[#allocation8 + $0x120] sm:$0xff]
        %v1605 = vld [vmem:[#allocation8 + $0x128] sm:$0xff]
        %v1606 = vld [vmem:[#allocation8 + $0x130] sm:$0xff]
        %v1607 = vld [vmem:[#allocation8 + $0x138] sm:$0xff]
        %v1608 = vld [vmem:[#allocation8 + $0x140] sm:$0xff]
        %v1609 = vld [vmem:[#allocation8 + $0x148] sm:$0xff]
        %v1610 = vld [vmem:[#allocation8 + $0x150] sm:$0xff]
        %v1611 = vld [vmem:[#allocation8 + $0x158] sm:$0xff]
        %v1612 = vld [vmem:[#allocation8 + $0x160] sm:$0xff]
        %v1613 = vld [vmem:[#allocation8 + $0x168] sm:$0xff]
        %v1614 = vld [vmem:[#allocation8 + $0x170] sm:$0xff]
        %v1615 = vld [vmem:[#allocation8 + $0x178] sm:$0xff]
        %1616 = vmatprep.subr.mxu0 0.0
        %1617 = vmatpush1.msra.mxu0 %v1600
        %1618 = vmatprep.subr.mxu0 0.0
        %1619 = vmatpush1.msra.mxu0 %v1601
        %1620 = vmatprep.subr.mxu0 0.0
        %1621 = vmatpush1.msra.mxu0 %v1602
        %1622 = vmatprep.subr.mxu0 0.0
        %1623 = vmatpush1.msra.mxu0 %v1603
        %1624 = vmatprep.subr.mxu0 0.0
        %1625 = vmatpush1.msra.mxu0 %v1604
        %1626 = vmatprep.subr.mxu0 0.0
        %1627 = vmatpush1.msra.mxu0 %v1605
        %1628 = vmatprep.subr.mxu0 0.0
        %1629 = vmatpush1.msra.mxu0 %v1606
        %1630 = vmatprep.subr.mxu0 0.0
        %1631 = vmatpush1.msra.mxu0 %v1607
        %1632 = vmatprep.subr.mxu0 0.0
        %1633 = vmatpush1.msra.mxu0 %v1608
        %1634 = vmatprep.subr.mxu0 0.0
        %1635 = vmatpush1.msra.mxu0 %v1609
        %1636 = vmatprep.subr.mxu0 0.0
        %1637 = vmatpush1.msra.mxu0 %v1610
        %1638 = vmatprep.subr.mxu0 0.0
        %1639 = vmatpush1.msra.mxu0 %v1611
        %1640 = vmatprep.subr.mxu0 0.0
        %1641 = vmatpush1.msra.mxu0 %v1612
        %1642 = vmatprep.subr.mxu0 0.0
        %1643 = vmatpush1.msra.mxu0 %v1613
        %1644 = vmatprep.subr.mxu0 0.0
        %1645 = vmatpush1.msra.mxu0 %v1614
        %1646 = vmatprep.subr.mxu0 0.0
        %1647 = vmatpush1.msra.mxu0 %v1615
        %1648 = vmatprep.subr.mxu0 0.0
        %1649 = vmatpush1.msra.mxu0 0.0
        %1650 = vmatprep.subr.mxu0 0.0
        %1651 = vmatpush1.msra.mxu0 0.0
        %1652 = vmatprep.subr.mxu0 0.0
        %1653 = vmatpush1.msra.mxu0 0.0
        %1654 = vmatprep.subr.mxu0 0.0
        %1655 = vmatpush1.msra.mxu0 0.0
        %1656 = vmatprep.subr.mxu0 0.0
        %1657 = vmatpush1.msra.mxu0 0.0
        %1658 = vmatprep.subr.mxu0 0.0
        %1659 = vmatpush1.msra.mxu0 0.0
        %1660 = vmatprep.subr.mxu0 0.0
        %1661 = vmatpush1.msra.mxu0 0.0
        %1662 = vmatprep.subr.mxu0 0.0
        %1663 = vmatpush1.msra.mxu0 0.0
        %1664 = vmatprep.subr.mxu0 0.0
        %1665 = vmatpush1.msra.mxu0 0.0
        %1666 = vmatprep.subr.mxu0 0.0
        %1667 = vmatpush1.msra.mxu0 0.0
        %1668 = vmatprep.subr.mxu0 0.0
        %1669 = vmatpush1.msra.mxu0 0.0
        %1670 = vmatprep.subr.mxu0 0.0
        %1671 = vmatpush1.msra.mxu0 0.0
        %1672 = vmatprep.subr.mxu0 0.0
        %1673 = vmatpush1.msra.mxu0 0.0
        %1674 = vmatprep.subr.mxu0 0.0
        %1675 = vmatpush1.msra.mxu0 0.0
        %1676 = vmatprep.subr.mxu0 0.0
        %1677 = vmatpush1.msra.mxu0 0.0
        %1678 = vmatprep.subr.mxu0 0.0
        %1679 = vmatpush1.msra.mxu0 0.0
        %1680 = vmatprep.mubr.f32.mxu0 0.0
        %1681 = vmatmul.mubr.f32.gmra.mrb[0].mxu0 %v1597
        %v1682 = vpop.f32.mrb[0].mxu0
        %v1683 = vadd.f32 0.0, %v1682
        %v1684 = vpop.f32.mrb[0].mxu0
        %1685 = vdwg.mxu0
        %v1686 = vadd.f32 %v1443, %v1683
        %1687 = vmatprep.subr.mxu0 0.0
        %1688 = vmatpush1.xpose.msra.mxu0 %v821
        %1689 = vmatprep.subr.mxu0 0.0
        %1690 = vmatpush1.xpose.msra.mxu0 0.0
        %1691 = vmatprep.subr.mxu0 0.0
        %1692 = vmatpush1.xpose.msra.mxu0 0.0
        %1693 = vmatprep.subr.mxu0 0.0
        %1694 = vmatpush1.xpose.msra.mxu0 0.0
        %1695 = vmatprep.subr.mxu0 0.0
        %1696 = vmatpush1.xpose.msra.mxu0 0.0
        %1697 = vmatprep.subr.mxu0 0.0
        %1698 = vmatpush1.xpose.msra.mxu0 0.0
        %1699 = vmatprep.subr.mxu0 0.0
        %1700 = vmatpush1.xpose.msra.mxu0 0.0
        %1701 = vmatprep.subr.mxu0 0.0
        %1702 = vmatpush1.xpose.msra.mxu0 0.0
        %1703 = vmatprep.subr.mxu0 0.0
        %1704 = vmatpush1.xpose.msra.mxu0 0.0
        %1705 = vmatprep.subr.mxu0 0.0
        %1706 = vmatpush1.xpose.msra.mxu0 0.0
        %1707 = vmatprep.subr.mxu0 0.0
        %1708 = vmatpush1.xpose.msra.mxu0 0.0
        %1709 = vmatprep.subr.mxu0 0.0
        %1710 = vmatpush1.xpose.msra.mxu0 0.0
        %1711 = vmatprep.subr.mxu0 0.0
        %1712 = vmatpush1.xpose.msra.mxu0 0.0
        %1713 = vmatprep.subr.mxu0 0.0
        %1714 = vmatpush1.xpose.msra.mxu0 0.0
        %1715 = vmatprep.subr.mxu0 0.0
        %1716 = vmatpush1.xpose.msra.mxu0 0.0
        %1717 = vmatprep.subr.mxu0 0.0
        %1718 = vmatpush1.xpose.msra.mxu0 0.0
        %1719 = vmatprep.subr.mxu0 0.0
        %1720 = vmatpush1.xpose.msra.mxu0 0.0
        %1721 = vmatprep.subr.mxu0 0.0
        %1722 = vmatpush1.xpose.msra.mxu0 0.0
        %1723 = vmatprep.subr.mxu0 0.0
        %1724 = vmatpush1.xpose.msra.mxu0 0.0
        %1725 = vmatprep.subr.mxu0 0.0
        %1726 = vmatpush1.xpose.msra.mxu0 0.0
        %1727 = vmatprep.subr.mxu0 0.0
        %1728 = vmatpush1.xpose.msra.mxu0 0.0
        %1729 = vmatprep.subr.mxu0 0.0
        %1730 = vmatpush1.xpose.msra.mxu0 0.0
        %1731 = vmatprep.subr.mxu0 0.0
        %1732 = vmatpush1.xpose.msra.mxu0 0.0
        %1733 = vmatprep.subr.mxu0 0.0
        %1734 = vmatpush1.xpose.msra.mxu0 0.0
        %1735 = vmatprep.subr.mxu0 0.0
        %1736 = vmatpush1.xpose.msra.mxu0 0.0
        %1737 = vmatprep.subr.mxu0 0.0
        %1738 = vmatpush1.xpose.msra.mxu0 0.0
        %1739 = vmatprep.subr.mxu0 0.0
        %1740 = vmatpush1.xpose.msra.mxu0 0.0
        %1741 = vmatprep.subr.mxu0 0.0
        %1742 = vmatpush1.xpose.msra.mxu0 0.0
        %1743 = vmatprep.subr.mxu0 0.0
        %1744 = vmatpush1.xpose.msra.mxu0 0.0
        %1745 = vmatprep.subr.mxu0 0.0
        %1746 = vmatpush1.xpose.msra.mxu0 0.0
        %1747 = vmatprep.subr.mxu0 0.0
        %1748 = vmatpush1.xpose.msra.mxu0 0.0
        %1749 = vmatprep.subr.mxu0 0.0
        %1750 = vmatpush1.xpose.msra.mxu0 0.0
        %1751 = vmatprep.mubr.f32.mxu0 0.0
        %1752 = vmatmul.mubr.f32.gmra.mrb[0].mxu0 %v679
        %v1753 = vpop.f32.mrb[0].mxu0
        %v1754 = vadd.f32 0.0, %v1753
        %v1755 = vpop.f32.mrb[0].mxu0
        %1756 = vdwg.mxu0
        %v1757 = vsel %vm1035, %v1754, -inf
        %1758 = vmax.xlane.f32.xlu0 %v1757
        %v1759 = vpop.xlane.xlu0 %1758
        %v1760 = vsub.f32 %v1754, %v1759
        %v1761 = vmul.f32 %v1760, 1.442695
        %v1762 = vpow.pop %v1761
        %v1763 = vsel %vm1035, %v1762, 0.0
        %1764 = vadd.xlane.f32.xlu0 %v1763
        %v1765 = vpop.xlane.xlu0 %1764
        %v1766 = vrcp.pop %v1765
        %v1767 = vmul.f32 %v1762, %v1766
        %v1769 = vsel %vm1035, %v1767, 0
        %1771 = vmatprep.subr.mxu0 0.0
        %1772 = vmatpush1.msra.mxu0 %v963
        %1773 = vmatprep.subr.mxu0 0.0
        %1774 = vmatpush1.msra.mxu0 0.0
        %1775 = vmatprep.subr.mxu0 0.0
        %1776 = vmatpush1.msra.mxu0 0.0
        %1777 = vmatprep.subr.mxu0 0.0
        %1778 = vmatpush1.msra.mxu0 0.0
        %1779 = vmatprep.subr.mxu0 0.0
        %1780 = vmatpush1.msra.mxu0 0.0
        %1781 = vmatprep.subr.mxu0 0.0
        %1782 = vmatpush1.msra.mxu0 0.0
        %1783 = vmatprep.subr.mxu0 0.0
        %1784 = vmatpush1.msra.mxu0 0.0
        %1785 = vmatprep.subr.mxu0 0.0
        %1786 = vmatpush1.msra.mxu0 0.0
        %1787 = vmatprep.subr.mxu0 0.0
        %1788 = vmatpush1.msra.mxu0 0.0
        %1789 = vmatprep.subr.mxu0 0.0
        %1790 = vmatpush1.msra.mxu0 0.0
        %1791 = vmatprep.subr.mxu0 0.0
        %1792 = vmatpush1.msra.mxu0 0.0
        %1793 = vmatprep.subr.mxu0 0.0
        %1794 = vmatpush1.msra.mxu0 0.0
        %1795 = vmatprep.subr.mxu0 0.0
        %1796 = vmatpush1.msra.mxu0 0.0
        %1797 = vmatprep.subr.mxu0 0.0
        %1798 = vmatpush1.msra.mxu0 0.0
        %1799 = vmatprep.subr.mxu0 0.0
        %1800 = vmatpush1.msra.mxu0 0.0
        %1801 = vmatprep.subr.mxu0 0.0
        %1802 = vmatpush1.msra.mxu0 0.0
        %1803 = vmatprep.subr.mxu0 0.0
        %1804 = vmatpush1.msra.mxu0 0.0
        %1805 = vmatprep.subr.mxu0 0.0
        %1806 = vmatpush1.msra.mxu0 0.0
        %1807 = vmatprep.subr.mxu0 0.0
        %1808 = vmatpush1.msra.mxu0 0.0
        %1809 = vmatprep.subr.mxu0 0.0
        %1810 = vmatpush1.msra.mxu0 0.0
        %1811 = vmatprep.subr.mxu0 0.0
        %1812 = vmatpush1.msra.mxu0 0.0
        %1813 = vmatprep.subr.mxu0 0.0
        %1814 = vmatpush1.msra.mxu0 0.0
        %1815 = vmatprep.subr.mxu0 0.0
        %1816 = vmatpush1.msra.mxu0 0.0
        %1817 = vmatprep.subr.mxu0 0.0
        %1818 = vmatpush1.msra.mxu0 0.0
        %1819 = vmatprep.subr.mxu0 0.0
        %1820 = vmatpush1.msra.mxu0 0.0
        %1821 = vmatprep.subr.mxu0 0.0
        %1822 = vmatpush1.msra.mxu0 0.0
        %1823 = vmatprep.subr.mxu0 0.0
        %1824 = vmatpush1.msra.mxu0 0.0
        %1825 = vmatprep.subr.mxu0 0.0
        %1826 = vmatpush1.msra.mxu0 0.0
        %1827 = vmatprep.subr.mxu0 0.0
        %1828 = vmatpush1.msra.mxu0 0.0
        %1829 = vmatprep.subr.mxu0 0.0
        %1830 = vmatpush1.msra.mxu0 0.0
        %1831 = vmatprep.subr.mxu0 0.0
        %1832 = vmatpush1.msra.mxu0 0.0
        %1833 = vmatprep.subr.mxu0 0.0
        %1834 = vmatpush1.msra.mxu0 0.0
        %1835 = vmatprep.mubr.f32.mxu0 0.0
        %1836 = vmatmul.mubr.f32.gmra.mrb[0].mxu0 %v1769
        %v1837 = vpop.f32.mrb[0].mxu0
        %v1838 = vadd.f32 0.0, %v1837
        %v1839 = vpop.f32.mrb[0].mxu0
        %1840 = vdwg.mxu0
        %v1841 = vld [vmem:[#allocation8 + $0x180] sm:$0xff]
        %v1842 = vld [vmem:[#allocation8 + $0x188] sm:$0xff]
        %v1843 = vld [vmem:[#allocation8 + $0x190] sm:$0xff]
        %v1844 = vld [vmem:[#allocation8 + $0x198] sm:$0xff]
        %v1845 = vld [vmem:[#allocation8 + $0x1a0] sm:$0xff]
        %v1846 = vld [vmem:[#allocation8 + $0x1a8] sm:$0xff]
        %v1847 = vld [vmem:[#allocation8 + $0x1b0] sm:$0xff]
        %v1848 = vld [vmem:[#allocation8 + $0x1b8] sm:$0xff]
        %v1849 = vld [vmem:[#allocation8 + $0x1c0] sm:$0xff]
        %v1850 = vld [vmem:[#allocation8 + $0x1c8] sm:$0xff]
        %v1851 = vld [vmem:[#allocation8 + $0x1d0] sm:$0xff]
        %v1852 = vld [vmem:[#allocation8 + $0x1d8] sm:$0xff]
        %v1853 = vld [vmem:[#allocation8 + $0x1e0] sm:$0xff]
        %v1854 = vld [vmem:[#allocation8 + $0x1e8] sm:$0xff]
        %v1855 = vld [vmem:[#allocation8 + $0x1f0] sm:$0xff]
        %v1856 = vld [vmem:[#allocation8 + $0x1f8] sm:$0xff]
        %1857 = vmatprep.subr.mxu0 0.0
        %1858 = vmatpush1.msra.mxu0 %v1841
        %1859 = vmatprep.subr.mxu0 0.0
        %1860 = vmatpush1.msra.mxu0 %v1842
        %1861 = vmatprep.subr.mxu0 0.0
        %1862 = vmatpush1.msra.mxu0 %v1843
        %1863 = vmatprep.subr.mxu0 0.0
        %1864 = vmatpush1.msra.mxu0 %v1844
        %1865 = vmatprep.subr.mxu0 0.0
        %1866 = vmatpush1.msra.mxu0 %v1845
        %1867 = vmatprep.subr.mxu0 0.0
        %1868 = vmatpush1.msra.mxu0 %v1846
        %1869 = vmatprep.subr.mxu0 0.0
        %1870 = vmatpush1.msra.mxu0 %v1847
        %1871 = vmatprep.subr.mxu0 0.0
        %1872 = vmatpush1.msra.mxu0 %v1848
        %1873 = vmatprep.subr.mxu0 0.0
        %1874 = vmatpush1.msra.mxu0 %v1849
        %1875 = vmatprep.subr.mxu0 0.0
        %1876 = vmatpush1.msra.mxu0 %v1850
        %1877 = vmatprep.subr.mxu0 0.0
        %1878 = vmatpush1.msra.mxu0 %v1851
        %1879 = vmatprep.subr.mxu0 0.0
        %1880 = vmatpush1.msra.mxu0 %v1852
        %1881 = vmatprep.subr.mxu0 0.0
        %1882 = vmatpush1.msra.mxu0 %v1853
        %1883 = vmatprep.subr.mxu0 0.0
        %1884 = vmatpush1.msra.mxu0 %v1854
        %1885 = vmatprep.subr.mxu0 0.0
        %1886 = vmatpush1.msra.mxu0 %v1855
        %1887 = vmatprep.subr.mxu0 0.0
        %1888 = vmatpush1.msra.mxu0 %v1856
        %1889 = vmatprep.subr.mxu0 0.0
        %1890 = vmatpush1.msra.mxu0 0.0
        %1891 = vmatprep.subr.mxu0 0.0
        %1892 = vmatpush1.msra.mxu0 0.0
        %1893 = vmatprep.subr.mxu0 0.0
        %1894 = vmatpush1.msra.mxu0 0.0
        %1895 = vmatprep.subr.mxu0 0.0
        %1896 = vmatpush1.msra.mxu0 0.0
        %1897 = vmatprep.subr.mxu0 0.0
        %1898 = vmatpush1.msra.mxu0 0.0
        %1899 = vmatprep.subr.mxu0 0.0
        %1900 = vmatpush1.msra.mxu0 0.0
        %1901 = vmatprep.subr.mxu0 0.0
        %1902 = vmatpush1.msra.mxu0 0.0
        %1903 = vmatprep.subr.mxu0 0.0
        %1904 = vmatpush1.msra.mxu0 0.0
        %1905 = vmatprep.subr.mxu0 0.0
        %1906 = vmatpush1.msra.mxu0 0.0
        %1907 = vmatprep.subr.mxu0 0.0
        %1908 = vmatpush1.msra.mxu0 0.0
        %1909 = vmatprep.subr.mxu0 0.0
        %1910 = vmatpush1.msra.mxu0 0.0
        %1911 = vmatprep.subr.mxu0 0.0
        %1912 = vmatpush1.msra.mxu0 0.0
        %1913 = vmatprep.subr.mxu0 0.0
        %1914 = vmatpush1.msra.mxu0 0.0
        %1915 = vmatprep.subr.mxu0 0.0
        %1916 = vmatpush1.msra.mxu0 0.0
        %1917 = vmatprep.subr.mxu0 0.0
        %1918 = vmatpush1.msra.mxu0 0.0
        %1919 = vmatprep.subr.mxu0 0.0
        %1920 = vmatpush1.msra.mxu0 0.0
        %1921 = vmatprep.mubr.f32.mxu0 0.0
        %1922 = vmatmul.mubr.f32.gmra.mrb[0].mxu0 %v1838
        %v1923 = vpop.f32.mrb[0].mxu0
        %v1924 = vadd.f32 0.0, %v1923
        %v1925 = vpop.f32.mrb[0].mxu0
        %1926 = vdwg.mxu0
        %v1927 = vadd.f32 %v1686, %v1924
        %v1928 = vld [vmem:[%s4] sm:$0x1]
        %v1930 = vlaneseq
        %v1931 = vshrl.u32 %v1930, 7
        %v1932 = vsub.s32 0, %v1931
        %v1933 = vrot.slane %v1928, %v1932
        %v1935 = vadd.f32 %v1927, %v1933
        %1936 = vst [vmem:[%s281] sm:$0xff] %v1935
        %s1937 = sand.u32 %s142, 1
        %s1938 = scalar_lea.sflag [#allocation4], %s1937
        %s1939 = sand.u32 %s142, 1
        %s1940 = smul.addr %s1939, 8
        %s1941 = scalar_lea.vmem [#allocation10], %s1940
        // Predicated region
        $region57: #{tpu_custom_call.1} parent=39 // pred_check
          %p1942 = pneg %p152
        $region58: #{tpu_custom_call.1} parent=39 // pred_check_branch
          %1944 = sbr.rel (%p1942) target = $region60
        $region59: #{tpu_custom_call.1} parent=39 // pred_region
          %s1946 = ssub.s32 128, 128
          %1947 = vsyncadd %s1938, %s1946
          %s1948 = smul.addr %s24, 128
          %s1949 = scalar_lea.hbm %s5, %s1948
          %s1951 = sshll.u32 %s1941, 4
          %s1952 = int_to_ptr.vmem [resolvable:$true] %s1951
          %1954 = dma.vmem_to_hbm [thread:$0]  %s1952, 128, %s1949, %s1938
        $region60: #{tpu_custom_call.1} parent=39 // pred_fallthru
          _
      $region40: #{tpu_custom_call.1} parent=5 // pred_fallthru
        _
      %p1955 = scmp.le.s32.totalorder 2, %s19
      // Predicated region
      $region61: #{tpu_custom_call.1} parent=5 // pred_check
        %p1956 = pneg %p1955
      $region62: #{tpu_custom_call.1} parent=5 // pred_check_branch
        %1958 = sbr.rel (%p1956) target = $region64
      $region63: #{tpu_custom_call.1} parent=5 // pred_region
        %s1959 = ssub.s32 %s19, 2
        // Predicated region
        $region65: #{tpu_custom_call.1} parent=63 // pred_check
          %p1960 = pneg %p158
        $region66: #{tpu_custom_call.1} parent=63 // pred_check_branch
          %1962 = sbr.rel (%p1960) target = $region68
        $region67: #{tpu_custom_call.1} parent=63 // pred_region
          %s1963 = sand.u32 %s143, 1
          %s1964 = scalar_lea.sflag [#allocation4], %s1963
          %s1965 = sand.u32 %s143, 1
          %s1966 = smul.addr %s1965, 8
          %s1967 = scalar_lea.vmem [#allocation10], %s1966
          %1968 = dma.done %s1964, 128
        $region68: #{tpu_custom_call.1} parent=63 // pred_fallthru
          _
      $region64: #{tpu_custom_call.1} parent=5 // pred_fallthru
        _
    $region6: #{tpu_custom_call.1} parent=1 // loop_footer
      %s23 = sadd.s32 1, %s19
    $region7: #{tpu_custom_call.1} parent=1 // loop_footer_branch
      %18 = sbr.rel target = $region3
    $region8: #{tpu_custom_call.1} parent=1 // loop_exit
      _
    %1969 = vsyncpa [#allocation3], 1
    %s1970 = scalar_lea.sflag [#allocation3], 1
    %1971 = vsyncpa %s1970, 1
    %1972 = vsyncpa [#allocation6], 1
    %1973 = vsyncpa [#allocation9], 1
    %1974 = vsyncpa [#allocation4], 1
    %s1975 = scalar_lea.sflag [#allocation4], 1
    %1976 = vsyncpa %s1975, 1

</llo_original>
